<compile_context>
chip_gen: v5e
topology: v5e:2x2
jax: 0.10.0
libtpu: 0.0.40
codegen_flags: <defaults>
</compile_context>

<pallas_src>
import functools

import jax
import jax.numpy as jnp
from jax import lax
from jax.experimental import pallas as pl
from jax.experimental.pallas import tpu as pltpu


# ----------------------------------------------------------------------------
# BlockSpec helpers (no grid: whole slabs live in VMEM, scalars in SMEM).
# TODO(synk): volumes whose (D*H, W) slab does not fit VMEM need a row-tiled
# grid with +/-H-row halos (dimension_semantics=("parallel",) for v7x's 2 TCs);
# whole-slab residency is fine at these demo shapes.
# ----------------------------------------------------------------------------
def _vmem():
    return pl.BlockSpec(memory_space=pltpu.MemorySpace.VMEM)


def _smem():
    return pl.BlockSpec(memory_space=pltpu.MemorySpace.SMEM)


# ----------------------------------------------------------------------------
# 7-point binary dilation on the (D*H, W) slab via masked shifts (no matmul).
# Row index r = d*H + h; zero padding at volume borders (matches padding=1
# conv + (>0) binarization of utils.DilateBinaryMask on a binary mask).
# ----------------------------------------------------------------------------
def _dilate_binary(x, H):
    DH, W = x.shape
    r = lax.broadcasted_iota(jnp.int32, (DH, W), 0)
    c = lax.broadcasted_iota(jnp.int32, (DH, W), 1)
    zero = jnp.zeros_like(x)
    acc = x                                                               # center
    if H > 1:
        acc = acc + jnp.where(r % H != 0,     jnp.roll(x,  1, axis=0), zero)  # h-1
        acc = acc + jnp.where(r % H != H - 1, jnp.roll(x, -1, axis=0), zero)  # h+1
    if DH > H:  # D > 1
        acc = acc + jnp.where(r >= H,         jnp.roll(x,  H, axis=0), zero)  # d-1
        acc = acc + jnp.where(r < DH - H,     jnp.roll(x, -H, axis=0), zero)  # d+1
    if W > 1:
        acc = acc + jnp.where(c >= 1,         jnp.roll(x,  1, axis=1), zero)  # w-1
        acc = acc + jnp.where(c <= W - 2,     jnp.roll(x, -1, axis=1), zero)  # w+1
    return jnp.where(acc > 0.0, 1.0, 0.0).astype(jnp.float32)


# ----------------------------------------------------------------------------
# Pallas kernels
# ----------------------------------------------------------------------------
def _bg_mask_kernel(labels_ref, x_ref, o_ref, *, n_bg):
    # _make_label_mask: union of (x == background_label_i) as a binary mask.
    x = x_ref[...]
    m = jnp.zeros_like(x)
    for i in range(n_bg):
        m = jnp.where(x == labels_ref[i], 1.0, m)
    o_ref[...] = m.astype(o_ref.dtype)


def _adjacency_kernel(m1_ref, m2_ref, o_ref, *, H):
    # _ResizeLabels._is_adjacent: dilate BOTH binary masks (exactly as the
    # reference does) and reduce the overlap to a single SMEM scalar.
    d1 = _dilate_binary(m1_ref[...], H)
    d2 = _dilate_binary(m2_ref[...], H)
    o_ref[0] = jnp.sum(d1 * d2)


def _grow_step_kernel(params_ref, bg_ref, trg_ref, u1_ref, u2_ref,
                      trg_out_ref, sum_ref, *, H):
    # One fused iteration of the positive-target branch of
    # _ResizeLabels._resize_labels on the lesion volume x_les
    # (labels: 0 = non-background, 1 = background, 2 = lesion):
    #   nbr  = (x_les == 1)  ==  bg * (1 - trg)           (exact invariant)
    #   dil  = dilate(trg) * nbr                          (7-point element)
    #   dil  = dropout(dil, dropout_rate)                 (dense uniforms in)
    #   cap: if dil.sum()/nbr.sum() > |max_vol_change|, second dropout
    #   trg += dil      (x_les = where(trg, 2, x_les) is implicit: trg IS the
    #                    set of label-2 voxels)
    # Emits sum(trg_new) to SMEM so the while-loop condition stays on device.
    # TODO(synk): only the grow (target > 0) path is fused on-device;
    # _AddLesions never exercises the shrink path of _ResizeLabels.
    trg = trg_ref[...]
    bg = bg_ref[...]
    nbr = bg * (1.0 - trg)
    dil = _dilate_binary(trg, H) * nbr

    dr = params_ref[0]                                    # dropout rate
    dil = jnp.where(u1_ref[...] >= dr, dil, 0.0)          # dense dropout

    abs_max = params_ref[1]                               # abs(max_vol_change)
    step_vol = jnp.sum(dil) / jnp.maximum(jnp.sum(nbr), 1e-12)
    dr2 = jnp.where(step_vol > abs_max,
                    (step_vol - abs_max) / jnp.maximum(step_vol, 1e-12),
                    0.0)
    dil = jnp.where(u2_ref[...] >= dr2, dil, 0.0)         # volume-cap dropout

    trg_new = trg + dil
    trg_out_ref[...] = trg_new.astype(trg_out_ref.dtype)
    sum_ref[0] = jnp.sum(trg_new)


def _apply_lesion_kernel(label_ref, mles_ref, x_ref, o_ref):
    # x[M_les > 0] = lesion_label   (output aliased onto x)
    o_ref[...] = jnp.where(mles_ref[...] > 0.0,
                           label_ref[0], x_ref[...]).astype(o_ref.dtype)


# ----------------------------------------------------------------------------
# pallas_call wrappers
# ----------------------------------------------------------------------------
def background_mask(x2d, bg_labels):
    labs = jnp.asarray(list(bg_labels), dtype=jnp.float32)
    return pl.pallas_call(
        functools.partial(_bg_mask_kernel, n_bg=len(bg_labels)),
        out_shape=jax.ShapeDtypeStruct(x2d.shape, jnp.float32),
        in_specs=[_smem(), _vmem()],
        out_specs=_vmem(),
    )(labs, x2d)


def adjacency_overlap(m1, m2, H):
    return pl.pallas_call(
        functools.partial(_adjacency_kernel, H=H),
        out_shape=jax.ShapeDtypeStruct((1,), jnp.float32),
        in_specs=[_vmem(), _vmem()],
        out_specs=_smem(),
    )(m1, m2)


def grow_step(bg, trg, u1, u2, dropout_rate, abs_max_change, H):
    params = jnp.stack([jnp.asarray(dropout_rate, jnp.float32),
                        jnp.asarray(abs_max_change, jnp.float32)])
    trg_new, s = pl.pallas_call(
        functools.partial(_grow_step_kernel, H=H),
        out_shape=(jax.ShapeDtypeStruct(trg.shape, jnp.float32),
                   jax.ShapeDtypeStruct((1,), jnp.float32)),
        in_specs=[_smem(), _vmem(), _vmem(), _vmem(), _vmem()],
        out_specs=(_vmem(), _smem()),
        input_output_aliases={2: 0},        # trg updated in place
    )(params, bg, trg, u1, u2)
    return trg_new, s[0]


def apply_lesions(x2d, m_les, label):
    lab = jnp.asarray([label], dtype=jnp.float32)
    return pl.pallas_call(
        _apply_lesion_kernel,
        out_shape=jax.ShapeDtypeStruct(x2d.shape, jnp.float32),
        in_specs=[_smem(), _vmem(), _vmem()],
        out_specs=_vmem(),
        input_output_aliases={2: 0},        # x rewritten in place
    )(lab, m_les, x2d)


# ----------------------------------------------------------------------------
# _AddLesions equivalent
# ----------------------------------------------------------------------------
class AddLesionsPallas:
    def __init__(self, input_shape, lesion_label=77, chance=0.5, max_n_lesions=1,
                 background_labels=(2, 41), background_buffer=3,
                 max_lesion_vol=20.0, lesion_dropout_rate=0.2, max_grow_iters=64):
        assert input_shape is not None, "Must provide input shape to _AddLesions"
        self.N, self.C, self.D, self.H, self.W = input_shape
        assert self.N == 1 and self.C == 1, "kernel assumes N=C=1"
        self.lesion_label = float(lesion_label)
        self.chance = float(chance)
        self.max_n_lesions = max_n_lesions          # unused: reference hard-codes 8
        self.background_buffer = background_buffer  # unused in the reference path
        self.background_labels = tuple(float(b) for b in background_labels)
        self.max_lesion_vol = float(max_lesion_vol)
        # _ResizeLabels(..., apply_dropout=True) -> default dropout_rate = 0.2
        self.dropout_rate = float(lesion_dropout_rate)
        # TODO(synk): the reference grow loop is unbounded; capped on device.
        self.max_grow_iters = int(max_grow_iters)
        self._insert = jax.jit(self._insert_lesions)

    # -- device-side lesion insertion (one jit, no host syncs inside) --------
    def _insert_lesions(self, x2d, key):
        DH, W, H = self.D * self.H, self.W, self.H
        # Background mask computed ONCE and reused (the reference builds n_bg
        # identical masks because _make_label_mask ignores its argument).
        bg = background_mask(x2d, self.background_labels)

        m_les = jnp.zeros_like(x2d)
        n_lesions = 8                       # hard-coded in the reference
        keys = jax.random.split(key, n_lesions)
        for n in range(n_lesions):
            k_vol, k_perc, k_seed, k_loop = jax.random.split(keys[n], 4)
            # lesion_vols = max_lesion_vol * rand(); then _randomize_atrophy
            # draws perc ~ U(0, max_perc).  (The reference's unused
            # torch.multinomial subset draw is omitted -- it errors for
            # single-label structure lists.)
            lesion_vol = self.max_lesion_vol * jax.random.uniform(k_vol, ())
            target = jax.random.uniform(k_perc, (), minval=0.0, maxval=lesion_vol)

            # Random seed voxel among nonzero background voxels
            # (masked argmax over iid uniforms == uniform choice).
            u = jax.random.uniform(k_seed, (DH, W))
            flat = jnp.argmax(jnp.where(bg > 0.0, u, -1.0).reshape(-1))
            trg0 = jnp.zeros((DH * W,), jnp.float32).at[flat].set(1.0).reshape(DH, W)
            nbr0 = bg * (1.0 - trg0)        # == (x_les == 1)

            # _is_adjacent(x_les, lesion=2, background=1) as a device scalar.
            adj = adjacency_overlap(trg0, nbr0, H)[0]
            orig_sum = jnp.sum(trg0)        # == 1

            dropout_rate = self.dropout_rate
            max_iters = self.max_grow_iters

            def cond_fn(state, target=target, adj=adj):
                _trg, _k, vol_change, it = state
                return ((jnp.abs(vol_change) < jnp.abs(target))
                        & (adj > 0.0) & (it < max_iters))

            def body_fn(state, bg=bg, target=target, orig_sum=orig_sum):
                trg, k, vol_change, it = state
                k, k1, k2 = jax.random.split(k, 3)
                u1 = jax.random.uniform(k1, (DH, W))
                u2 = jax.random.uniform(k2, (DH, W))
                change_remaining = target - vol_change
                trg, trg_sum = grow_step(bg, trg, u1, u2,
                                         dropout_rate, change_remaining, H)
                vol_change = (trg_sum - orig_sum) / jnp.maximum(orig_sum, 1e-12)
                return (trg, k, vol_change, it + jnp.int32(1))

            trg_fin, _, _, _ = lax.while_loop(
                cond_fn, body_fn,
                (trg0, k_loop, jnp.float32(0.0), jnp.int32(0)))

            # M_les[x_les == 2] = 1   (trg_fin IS the set of label-2 voxels)
            m_les = jnp.maximum(m_les, trg_fin)

        # x[M_les > 0] = lesion_label
        return apply_lesions(x2d, m_les, self.lesion_label)

    # -- forward --------------------------------------------------------------
    def forward(self, x, key):
        N, C, D, H, W = x.shape
        key, k_chance, k_ins = jax.random.split(key, 3)
        # Single scalar host read per forward (the reference uses Python random
        # for the same gate).
        if float(jax.random.uniform(k_chance, ())) <= self.chance:
            x2d = x.reshape(D * H, W).astype(jnp.float32)
            x2d = self._insert(x2d, k_ins)
            x = x2d.reshape(N, C, D, H, W)
        return x


# ----------------------------------------------------------------------------
# Demo
# ----------------------------------------------------------------------------
if __name__ == "__main__":
    key = jax.random.PRNGKey(0)
    N, C, D, H, W = 1, 1, 8, 16, 128   # small, tile-aligned 3-D label volume

    # Deterministic synthetic label map containing the background labels 2 / 41.
    x = jnp.zeros((N, C, D, H, W), jnp.float32)
    x = x.at[:, :, 1:7, 2:14, 8:64].set(2.0)
    x = x.at[:, :, 1:7, 2:14, 64:120].set(41.0)

    model = AddLesionsPallas(input_shape=(N, C, D, H, W), chance=1.0)
    key, k = jax.random.split(key)
    y = model.forward(x, k)
    y = jax.block_until_ready(y)

    assert y.shape == x.shape and y.dtype == jnp.float32
    # Lesion label should have been written somewhere inside the background.
    assert float(jnp.sum(y == model.lesion_label)) > 0.0
    print("KERNEL_OK")
</pallas_src>

<mosaic_0001>
module attributes {stable_mosaic.version = 11 : i64} {
  func.func @_bg_mask_kernel(%arg0: memref<2xf32, #tpu.memory_space<smem>>, %arg1: memref<128x128xf32, #tpu.memory_space<vmem>>, %arg2: memref<128x128xf32, #tpu.memory_space<vmem>>) attributes {dimension_semantics = [], scalar_prefetch = 0 : i64, scratch_operands = 0 : i64, tpu.core_type = #tpu.core_type<tc>} {
    %c0 = arith.constant 0 : index
    %c0_0 = arith.constant 0 : index
    %0 = vector.load %arg1[%c0, %c0_0] : memref<128x128xf32, #tpu.memory_space<vmem>>, vector<128x128xf32>
    %cst = arith.constant 0.000000e+00 : f32
    %1 = vector.broadcast %cst : f32 to vector<128x128xf32>
    %c0_1 = arith.constant 0 : index
    %2 = memref.load %arg0[%c0_1] : memref<2xf32, #tpu.memory_space<smem>>
    %3 = vector.broadcast %2 : f32 to vector<128x128xf32>
    %4 = arith.cmpf oeq, %0, %3 : vector<128x128xf32>
    %cst_2 = arith.constant 1.000000e+00 : f32
    %5 = vector.broadcast %cst_2 : f32 to vector<128x128xf32>
    %6 = arith.select %4, %5, %1 : vector<128x128xi1>, vector<128x128xf32>
    %c1 = arith.constant 1 : index
    %7 = memref.load %arg0[%c1] : memref<2xf32, #tpu.memory_space<smem>>
    %8 = vector.broadcast %7 : f32 to vector<128x128xf32>
    %9 = arith.cmpf oeq, %0, %8 : vector<128x128xf32>
    %cst_3 = arith.constant 1.000000e+00 : f32
    %10 = vector.broadcast %cst_3 : f32 to vector<128x128xf32>
    %11 = arith.select %9, %10, %6 : vector<128x128xi1>, vector<128x128xf32>
    %c0_4 = arith.constant 0 : index
    %c0_5 = arith.constant 0 : index
    %12 = vector.load %arg2[%c0_4, %c0_5] : memref<128x128xf32, #tpu.memory_space<vmem>>, vector<128x128xf32>
    tpu.vector_store %arg2[%c0_4, %c0_5], %11 {strides = array<i32>} : memref<128x128xf32, #tpu.memory_space<vmem>>, vector<128x128xf32>,
    return
  }
}

module attributes {stable_mosaic.version = 11 : i64} {
  func.func @_adjacency_kernel(%arg0: memref<128x128xf32, #tpu.memory_space<vmem>>, %arg1: memref<128x128xf32, #tpu.memory_space<vmem>>, %arg2: memref<1xf32, #tpu.memory_space<smem>>) attributes {dimension_semantics = [], scalar_prefetch = 0 : i64, scratch_operands = 0 : i64, tpu.core_type = #tpu.core_type<tc>} {
    %c0 = arith.constant 0 : index
    %c0_0 = arith.constant 0 : index
    %0 = vector.load %arg0[%c0, %c0_0] : memref<128x128xf32, #tpu.memory_space<vmem>>, vector<128x128xf32>
    %1 = tpu.iota {dimensions = array<i32: 0>} : vector<128x128xi32>
    %2 = tpu.iota {dimensions = array<i32: 1>} : vector<128x128xi32>
    %cst = arith.constant 0.000000e+00 : f32
    %3 = vector.broadcast %cst : f32 to vector<128x128xf32>
    %c16_i32 = arith.constant 16 : i32
    %c0_i32 = arith.constant 0 : i32
    %4 = arith.cmpi eq, %c16_i32, %c0_i32 : i32
    %c1_i32 = arith.constant 1 : i32
    %5 = arith.select %4, %c1_i32, %c16_i32 : i32
    %6 = vector.broadcast %5 : i32 to vector<128x128xi32>
    %7 = arith.remsi %1, %6 : vector<128x128xi32>
    %c0_i32_1 = arith.constant 0 : i32
    %8 = vector.broadcast %c0_i32_1 : i32 to vector<128x128xi32>
    %9 = arith.cmpi ne, %7, %8 : vector<128x128xi32>
    %c0_i32_2 = arith.constant 0 : i32
    %10 = vector.broadcast %c0_i32_2 : i32 to vector<128x128xi32>
    %11 = arith.cmpi slt, %7, %10 : vector<128x128xi32>
    %c0_i32_3 = arith.constant 0 : i32
    %12 = arith.cmpi slt, %5, %c0_i32_3 : i32
    %13 = vector.broadcast %12 : i1 to vector<128x128xi1>
    %14 = vector.broadcast %13 : vector<128x128xi1> to vector<128x128xi1>
    %15 = arith.xori %11, %14 : vector<128x128xi1>
    %16 = arith.andi %15, %9 : vector<128x128xi1>
    %17 = vector.broadcast %5 : i32 to vector<128x128xi32>
    %18 = arith.addi %7, %17 : vector<128x128xi32>
    %19 = arith.select %16, %18, %7 : vector<128x128xi1>, vector<128x128xi32>
    %c0_i32_4 = arith.constant 0 : i32
    %20 = vector.broadcast %c0_i32_4 : i32 to vector<128x128xi32>
    %21 = arith.cmpi ne, %19, %20 : vector<128x128xi32>
    %22 = vector.extract_strided_slice %0 {offsets = [127, 0], sizes = [1, 128], strides = [1, 1]} : vector<128x128xf32> to vector<1x128xf32>
    %23 = vector.extract_strided_slice %0 {offsets = [0, 0], sizes = [127, 128], strides = [1, 1]} : vector<128x128xf32> to vector<127x128xf32>
    %24 = tpu.concatenate %22, %23 in 0 : vector<1x128xf32>, vector<127x128xf32> -> vector<128x128xf32>
    %25 = arith.select %21, %24, %3 : vector<128x128xi1>, vector<128x128xf32>
    %26 = arith.addf %0, %25 : vector<128x128xf32>
    %c16_i32_5 = arith.constant 16 : i32
    %c0_i32_6 = arith.constant 0 : i32
    %27 = arith.cmpi eq, %c16_i32_5, %c0_i32_6 : i32
    %c1_i32_7 = arith.constant 1 : i32
    %28 = arith.select %27, %c1_i32_7, %c16_i32_5 : i32
    %29 = vector.broadcast %28 : i32 to vector<128x128xi32>
    %30 = arith.remsi %1, %29 : vector<128x128xi32>
    %c0_i32_8 = arith.constant 0 : i32
    %31 = vector.broadcast %c0_i32_8 : i32 to vector<128x128xi32>
    %32 = arith.cmpi ne, %30, %31 : vector<128x128xi32>
    %c0_i32_9 = arith.constant 0 : i32
    %33 = vector.broadcast %c0_i32_9 : i32 to vector<128x128xi32>
    %34 = arith.cmpi slt, %30, %33 : vector<128x128xi32>
    %c0_i32_10 = arith.constant 0 : i32
    %35 = arith.cmpi slt, %28, %c0_i32_10 : i32
    %36 = vector.broadcast %35 : i1 to vector<128x128xi1>
    %37 = vector.broadcast %36 : vector<128x128xi1> to vector<128x128xi1>
    %38 = arith.xori %34, %37 : vector<128x128xi1>
    %39 = arith.andi %38, %32 : vector<128x128xi1>
    %40 = vector.broadcast %28 : i32 to vector<128x128xi32>
    %41 = arith.addi %30, %40 : vector<128x128xi32>
    %42 = arith.select %39, %41, %30 : vector<128x128xi1>, vector<128x128xi32>
    %c15_i32 = arith.constant 15 : i32
    %43 = vector.broadcast %c15_i32 : i32 to vector<128x128xi32>
    %44 = arith.cmpi ne, %42, %43 : vector<128x128xi32>
    %45 = vector.extract_strided_slice %0 {offsets = [1, 0], sizes = [127, 128], strides = [1, 1]} : vector<128x128xf32> to vector<127x128xf32>
    %46 = vector.extract_strided_slice %0 {offsets = [0, 0], sizes = [1, 128], strides = [1, 1]} : vector<128x128xf32> to vector<1x128xf32>
    %47 = tpu.concatenate %45, %46 in 0 : vector<127x128xf32>, vector<1x128xf32> -> vector<128x128xf32>
    %48 = arith.select %44, %47, %3 : vector<128x128xi1>, vector<128x128xf32>
    %49 = arith.addf %26, %48 : vector<128x128xf32>
    %c16_i32_11 = arith.constant 16 : i32
    %50 = vector.broadcast %c16_i32_11 : i32 to vector<128x128xi32>
    %51 = arith.cmpi sge, %1, %50 : vector<128x128xi32>
    %52 = vector.extract_strided_slice %0 {offsets = [112, 0], sizes = [16, 128], strides = [1, 1]} : vector<128x128xf32> to vector<16x128xf32>
    %53 = vector.extract_strided_slice %0 {offsets = [0, 0], sizes = [112, 128], strides = [1, 1]} : vector<128x128xf32> to vector<112x128xf32>
    %54 = tpu.concatenate %52, %53 in 0 : vector<16x128xf32>, vector<112x128xf32> -> vector<128x128xf32>
    %55 = arith.select %51, %54, %3 : vector<128x128xi1>, vector<128x128xf32>
    %56 = arith.addf %49, %55 : vector<128x128xf32>
    %c112_i32 = arith.constant 112 : i32
    %57 = vector.broadcast %c112_i32 : i32 to vector<128x128xi32>
    %58 = arith.cmpi slt, %1, %57 : vector<128x128xi32>
    %59 = vector.extract_strided_slice %0 {offsets = [16, 0], sizes = [112, 128], strides = [1, 1]} : vector<128x128xf32> to vector<112x128xf32>
    %60 = vector.extract_strided_slice %0 {offsets = [0, 0], sizes = [16, 128], strides = [1, 1]} : vector<128x128xf32> to vector<16x128xf32>
    %61 = tpu.concatenate %59, %60 in 0 : vector<112x128xf32>, vector<16x128xf32> -> vector<128x128xf32>
    %62 = arith.select %58, %61, %3 : vector<128x128xi1>, vector<128x128xf32>
    %63 = arith.addf %56, %62 : vector<128x128xf32>
    %c1_i32_12 = arith.constant 1 : i32
    %64 = vector.broadcast %c1_i32_12 : i32 to vector<128x128xi32>
    %65 = arith.cmpi sge, %2, %64 : vector<128x128xi32>
    %66 = vector.extract_strided_slice %0 {offsets = [0, 127], sizes = [128, 1], strides = [1, 1]} : vector<128x128xf32> to vector<128x1xf32>
    %67 = vector.extract_strided_slice %0 {offsets = [0, 0], sizes = [128, 127], strides = [1, 1]} : vector<128x128xf32> to vector<128x127xf32>
    %68 = tpu.concatenate %66, %67 in 1 : vector<128x1xf32>, vector<128x127xf32> -> vector<128x128xf32>
    %69 = arith.select %65, %68, %3 : vector<128x128xi1>, vector<128x128xf32>
    %70 = arith.addf %63, %69 : vector<128x128xf32>
    %c126_i32 = arith.constant 126 : i32
    %71 = vector.broadcast %c126_i32 : i32 to vector<128x128xi32>
    %72 = arith.cmpi sle, %2, %71 : vector<128x128xi32>
    %73 = vector.extract_strided_slice %0 {offsets = [0, 1], sizes = [128, 127], strides = [1, 1]} : vector<128x128xf32> to vector<128x127xf32>
    %74 = vector.extract_strided_slice %0 {offsets = [0, 0], sizes = [128, 1], strides = [1, 1]} : vector<128x128xf32> to vector<128x1xf32>
    %75 = tpu.concatenate %73, %74 in 1 : vector<128x127xf32>, vector<128x1xf32> -> vector<128x128xf32>
    %76 = arith.select %72, %75, %3 : vector<128x128xi1>, vector<128x128xf32>
    %77 = arith.addf %70, %76 : vector<128x128xf32>
    %cst_13 = arith.constant 0.000000e+00 : f32
    %78 = vector.broadcast %cst_13 : f32 to vector<128x128xf32>
    %79 = arith.cmpf ogt, %77, %78 : vector<128x128xf32>
    %cst_14 = arith.constant 1.000000e+00 : f32
    %cst_15 = arith.constant 0.000000e+00 : f32
    %80 = vector.broadcast %cst_14 : f32 to vector<128x128xf32>
    %81 = vector.broadcast %cst_15 : f32 to vector<128x128xf32>
    %82 = arith.select %79, %80, %81 : vector<128x128xi1>, vector<128x128xf32>
    %c0_16 = arith.constant 0 : index
    %c0_17 = arith.constant 0 : index
    %83 = vector.load %arg1[%c0_16, %c0_17] : memref<128x128xf32, #tpu.memory_space<vmem>>, vector<128x128xf32>
    %84 = tpu.iota {dimensions = array<i32: 0>} : vector<128x128xi32>
    %85 = tpu.iota {dimensions = array<i32: 1>} : vector<128x128xi32>
    %cst_18 = arith.constant 0.000000e+00 : f32
    %86 = vector.broadcast %cst_18 : f32 to vector<128x128xf32>
    %c16_i32_19 = arith.constant 16 : i32
    %c0_i32_20 = arith.constant 0 : i32
    %87 = arith.cmpi eq, %c16_i32_19, %c0_i32_20 : i32
    %c1_i32_21 = arith.constant 1 : i32
    %88 = arith.select %87, %c1_i32_21, %c16_i32_19 : i32
    %89 = vector.broadcast %88 : i32 to vector<128x128xi32>
    %90 = arith.remsi %84, %89 : vector<128x128xi32>
    %c0_i32_22 = arith.constant 0 : i32
    %91 = vector.broadcast %c0_i32_22 : i32 to vector<128x128xi32>
    %92 = arith.cmpi ne, %90, %91 : vector<128x128xi32>
    %c0_i32_23 = arith.constant 0 : i32
    %93 = vector.broadcast %c0_i32_23 : i32 to vector<128x128xi32>
    %94 = arith.cmpi slt, %90, %93 : vector<128x128xi32>
    %c0_i32_24 = arith.constant 0 : i32
    %95 = arith.cmpi slt, %88, %c0_i32_24 : i32
    %96 = vector.broadcast %95 : i1 to vector<128x128xi1>
    %97 = vector.broadcast %96 : vector<128x128xi1> to vector<128x128xi1>
    %98 = arith.xori %94, %97 : vector<128x128xi1>
    %99 = arith.andi %98, %92 : vector<128x128xi1>
    %100 = vector.broadcast %88 : i32 to vector<128x128xi32>
    %101 = arith.addi %90, %100 : vector<128x128xi32>
    %102 = arith.select %99, %101, %90 : vector<128x128xi1>, vector<128x128xi32>
    %c0_i32_25 = arith.constant 0 : i32
    %103 = vector.broadcast %c0_i32_25 : i32 to vector<128x128xi32>
    %104 = arith.cmpi ne, %102, %103 : vector<128x128xi32>
    %105 = vector.extract_strided_slice %83 {offsets = [127, 0], sizes = [1, 128], strides = [1, 1]} : vector<128x128xf32> to vector<1x128xf32>
    %106 = vector.extract_strided_slice %83 {offsets = [0, 0], sizes = [127, 128], strides = [1, 1]} : vector<128x128xf32> to vector<127x128xf32>
    %107 = tpu.concatenate %105, %106 in 0 : vector<1x128xf32>, vector<127x128xf32> -> vector<128x128xf32>
    %108 = arith.select %104, %107, %86 : vector<128x128xi1>, vector<128x128xf32>
    %109 = arith.addf %83, %108 : vector<128x128xf32>
    %c16_i32_26 = arith.constant 16 : i32
    %c0_i32_27 = arith.constant 0 : i32
    %110 = arith.cmpi eq, %c16_i32_26, %c0_i32_27 : i32
    %c1_i32_28 = arith.constant 1 : i32
    %111 = arith.select %110, %c1_i32_28, %c16_i32_26 : i32
    %112 = vector.broadcast %111 : i32 to vector<128x128xi32>
    %113 = arith.remsi %84, %112 : vector<128x128xi32>
    %c0_i32_29 = arith.constant 0 : i32
    %114 = vector.broadcast %c0_i32_29 : i32 to vector<128x128xi32>
    %115 = arith.cmpi ne, %113, %114 : vector<128x128xi32>
    %c0_i32_30 = arith.constant 0 : i32
    %116 = vector.broadcast %c0_i32_30 : i32 to vector<128x128xi32>
    %117 = arith.cmpi slt, %113, %116 : vector<128x128xi32>
    %c0_i32_31 = arith.constant 0 : i32
    %118 = arith.cmpi slt, %111, %c0_i32_31 : i32
    %119 = vector.broadcast %118 : i1 to vector<128x128xi1>
    %120 = vector.broadcast %119 : vector<128x128xi1> to vector<128x128xi1>
    %121 = arith.xori %117, %120 : vector<128x128xi1>
    %122 = arith.andi %121, %115 : vector<128x128xi1>
    %123 = vector.broadcast %111 : i32 to vector<128x128xi32>
    %124 = arith.addi %113, %123 : vector<128x128xi32>
    %125 = arith.select %122, %124, %113 : vector<128x128xi1>, vector<128x128xi32>
    %c15_i32_32 = arith.constant 15 : i32
    %126 = vector.broadcast %c15_i32_32 : i32 to vector<128x128xi32>
    %127 = arith.cmpi ne, %125, %126 : vector<128x128xi32>
    %128 = vector.extract_strided_slice %83 {offsets = [1, 0], sizes = [127, 128], strides = [1, 1]} : vector<128x128xf32> to vector<127x128xf32>
    %129 = vector.extract_strided_slice %83 {offsets = [0, 0], sizes = [1, 128], strides = [1, 1]} : vector<128x128xf32> to vector<1x128xf32>
    %130 = tpu.concatenate %128, %129 in 0 : vector<127x128xf32>, vector<1x128xf32> -> vector<128x128xf32>
    %131 = arith.select %127, %130, %86 : vector<128x128xi1>, vector<128x128xf32>
    %132 = arith.addf %109, %131 : vector<128x128xf32>
    %c16_i32_33 = arith.constant 16 : i32
    %133 = vector.broadcast %c16_i32_33 : i32 to vector<128x128xi32>
    %134 = arith.cmpi sge, %84, %133 : vector<128x128xi32>
    %135 = vector.extract_strided_slice %83 {offsets = [112, 0], sizes = [16, 128], strides = [1, 1]} : vector<128x128xf32> to vector<16x128xf32>
    %136 = vector.extract_strided_slice %83 {offsets = [0, 0], sizes = [112, 128], strides = [1, 1]} : vector<128x128xf32> to vector<112x128xf32>
    %137 = tpu.concatenate %135, %136 in 0 : vector<16x128xf32>, vector<112x128xf32> -> vector<128x128xf32>
    %138 = arith.select %134, %137, %86 : vector<128x128xi1>, vector<128x128xf32>
    %139 = arith.addf %132, %138 : vector<128x128xf32>
    %c112_i32_34 = arith.constant 112 : i32
    %140 = vector.broadcast %c112_i32_34 : i32 to vector<128x128xi32>
    %141 = arith.cmpi slt, %84, %140 : vector<128x128xi32>
    %142 = vector.extract_strided_slice %83 {offsets = [16, 0], sizes = [112, 128], strides = [1, 1]} : vector<128x128xf32> to vector<112x128xf32>
    %143 = vector.extract_strided_slice %83 {offsets = [0, 0], sizes = [16, 128], strides = [1, 1]} : vector<128x128xf32> to vector<16x128xf32>
    %144 = tpu.concatenate %142, %143 in 0 : vector<112x128xf32>, vector<16x128xf32> -> vector<128x128xf32>
    %145 = arith.select %141, %144, %86 : vector<128x128xi1>, vector<128x128xf32>
    %146 = arith.addf %139, %145 : vector<128x128xf32>
    %c1_i32_35 = arith.constant 1 : i32
    %147 = vector.broadcast %c1_i32_35 : i32 to vector<128x128xi32>
    %148 = arith.cmpi sge, %85, %147 : vector<128x128xi32>
    %149 = vector.extract_strided_slice %83 {offsets = [0, 127], sizes = [128, 1], strides = [1, 1]} : vector<128x128xf32> to vector<128x1xf32>
    %150 = vector.extract_strided_slice %83 {offsets = [0, 0], sizes = [128, 127], strides = [1, 1]} : vector<128x128xf32> to vector<128x127xf32>
    %151 = tpu.concatenate %149, %150 in 1 : vector<128x1xf32>, vector<128x127xf32> -> vector<128x128xf32>
    %152 = arith.select %148, %151, %86 : vector<128x128xi1>, vector<128x128xf32>
    %153 = arith.addf %146, %152 : vector<128x128xf32>
    %c126_i32_36 = arith.constant 126 : i32
    %154 = vector.broadcast %c126_i32_36 : i32 to vector<128x128xi32>
    %155 = arith.cmpi sle, %85, %154 : vector<128x128xi32>
    %156 = vector.extract_strided_slice %83 {offsets = [0, 1], sizes = [128, 127], strides = [1, 1]} : vector<128x128xf32> to vector<128x127xf32>
    %157 = vector.extract_strided_slice %83 {offsets = [0, 0], sizes = [128, 1], strides = [1, 1]} : vector<128x128xf32> to vector<128x1xf32>
    %158 = tpu.concatenate %156, %157 in 1 : vector<128x127xf32>, vector<128x1xf32> -> vector<128x128xf32>
    %159 = arith.select %155, %158, %86 : vector<128x128xi1>, vector<128x128xf32>
    %160 = arith.addf %153, %159 : vector<128x128xf32>
    %cst_37 = arith.constant 0.000000e+00 : f32
    %161 = vector.broadcast %cst_37 : f32 to vector<128x128xf32>
    %162 = arith.cmpf ogt, %160, %161 : vector<128x128xf32>
    %cst_38 = arith.constant 1.000000e+00 : f32
    %cst_39 = arith.constant 0.000000e+00 : f32
    %163 = vector.broadcast %cst_38 : f32 to vector<128x128xf32>
    %164 = vector.broadcast %cst_39 : f32 to vector<128x128xf32>
    %165 = arith.select %162, %163, %164 : vector<128x128xi1>, vector<128x128xf32>
    %166 = arith.mulf %82, %165 : vector<128x128xf32>
    %167 = vector.shape_cast %166 : vector<128x128xf32> to vector<1x128x128xf32>
    %cst_40 = arith.constant dense<0.000000e+00> : vector<1xf32>
    %168 = vector.multi_reduction <add>, %167, %cst_40 [1, 2] : vector<1x128x128xf32> to vector<1xf32>
    %169 = vector.shape_cast %168 : vector<1xf32> to vector<1x1x1xf32>
    %170 = vector.extract %169[0, 0, 0] : f32 from vector<1x1x1xf32>
    %c0_41 = arith.constant 0 : index
    %171 = memref.load %arg2[%c0_41] : memref<1xf32, #tpu.memory_space<smem>>
    memref.store %170, %arg2[%c0_41] : memref<1xf32, #tpu.memory_space<smem>>
    return
  }
}

module attributes {stable_mosaic.version = 11 : i64} {
  func.func @_grow_step_kernel(%arg0: memref<2xf32, #tpu.memory_space<smem>>, %arg1: memref<128x128xf32, #tpu.memory_space<vmem>>, %arg2: memref<128x128xf32, #tpu.memory_space<vmem>>, %arg3: memref<128x128xf32, #tpu.memory_space<vmem>>, %arg4: memref<128x128xf32, #tpu.memory_space<vmem>>, %arg5: memref<128x128xf32, #tpu.memory_space<vmem>>, %arg6: memref<1xf32, #tpu.memory_space<smem>>) attributes {dimension_semantics = [], scalar_prefetch = 0 : i64, scratch_operands = 0 : i64, tpu.core_type = #tpu.core_type<tc>} {
    %c0 = arith.constant 0 : index
    %c0_0 = arith.constant 0 : index
    %0 = vector.load %arg2[%c0, %c0_0] : memref<128x128xf32, #tpu.memory_space<vmem>>, vector<128x128xf32>
    %c0_1 = arith.constant 0 : index
    %c0_2 = arith.constant 0 : index
    %1 = vector.load %arg1[%c0_1, %c0_2] : memref<128x128xf32, #tpu.memory_space<vmem>>, vector<128x128xf32>
    %cst = arith.constant 1.000000e+00 : f32
    %2 = vector.broadcast %cst : f32 to vector<128x128xf32>
    %3 = arith.subf %2, %0 : vector<128x128xf32>
    %4 = arith.mulf %1, %3 : vector<128x128xf32>
    %5 = tpu.iota {dimensions = array<i32: 0>} : vector<128x128xi32>
    %6 = tpu.iota {dimensions = array<i32: 1>} : vector<128x128xi32>
    %cst_3 = arith.constant 0.000000e+00 : f32
    %7 = vector.broadcast %cst_3 : f32 to vector<128x128xf32>
    %c16_i32 = arith.constant 16 : i32
    %c0_i32 = arith.constant 0 : i32
    %8 = arith.cmpi eq, %c16_i32, %c0_i32 : i32
    %c1_i32 = arith.constant 1 : i32
    %9 = arith.select %8, %c1_i32, %c16_i32 : i32
    %10 = vector.broadcast %9 : i32 to vector<128x128xi32>
    %11 = arith.remsi %5, %10 : vector<128x128xi32>
    %c0_i32_4 = arith.constant 0 : i32
    %12 = vector.broadcast %c0_i32_4 : i32 to vector<128x128xi32>
    %13 = arith.cmpi ne, %11, %12 : vector<128x128xi32>
    %c0_i32_5 = arith.constant 0 : i32
    %14 = vector.broadcast %c0_i32_5 : i32 to vector<128x128xi32>
    %15 = arith.cmpi slt, %11, %14 : vector<128x128xi32>
    %c0_i32_6 = arith.constant 0 : i32
    %16 = arith.cmpi slt, %9, %c0_i32_6 : i32
    %17 = vector.broadcast %16 : i1 to vector<128x128xi1>
    %18 = vector.broadcast %17 : vector<128x128xi1> to vector<128x128xi1>
    %19 = arith.xori %15, %18 : vector<128x128xi1>
    %20 = arith.andi %19, %13 : vector<128x128xi1>
    %21 = vector.broadcast %9 : i32 to vector<128x128xi32>
    %22 = arith.addi %11, %21 : vector<128x128xi32>
    %23 = arith.select %20, %22, %11 : vector<128x128xi1>, vector<128x128xi32>
    %c0_i32_7 = arith.constant 0 : i32
    %24 = vector.broadcast %c0_i32_7 : i32 to vector<128x128xi32>
    %25 = arith.cmpi ne, %23, %24 : vector<128x128xi32>
    %26 = vector.extract_strided_slice %0 {offsets = [127, 0], sizes = [1, 128], strides = [1, 1]} : vector<128x128xf32> to vector<1x128xf32>
    %27 = vector.extract_strided_slice %0 {offsets = [0, 0], sizes = [127, 128], strides = [1, 1]} : vector<128x128xf32> to vector<127x128xf32>
    %28 = tpu.concatenate %26, %27 in 0 : vector<1x128xf32>, vector<127x128xf32> -> vector<128x128xf32>
    %29 = arith.select %25, %28, %7 : vector<128x128xi1>, vector<128x128xf32>
    %30 = arith.addf %0, %29 : vector<128x128xf32>
    %c16_i32_8 = arith.constant 16 : i32
    %c0_i32_9 = arith.constant 0 : i32
    %31 = arith.cmpi eq, %c16_i32_8, %c0_i32_9 : i32
    %c1_i32_10 = arith.constant 1 : i32
    %32 = arith.select %31, %c1_i32_10, %c16_i32_8 : i32
    %33 = vector.broadcast %32 : i32 to vector<128x128xi32>
    %34 = arith.remsi %5, %33 : vector<128x128xi32>
    %c0_i32_11 = arith.constant 0 : i32
    %35 = vector.broadcast %c0_i32_11 : i32 to vector<128x128xi32>
    %36 = arith.cmpi ne, %34, %35 : vector<128x128xi32>
    %c0_i32_12 = arith.constant 0 : i32
    %37 = vector.broadcast %c0_i32_12 : i32 to vector<128x128xi32>
    %38 = arith.cmpi slt, %34, %37 : vector<128x128xi32>
    %c0_i32_13 = arith.constant 0 : i32
    %39 = arith.cmpi slt, %32, %c0_i32_13 : i32
    %40 = vector.broadcast %39 : i1 to vector<128x128xi1>
    %41 = vector.broadcast %40 : vector<128x128xi1> to vector<128x128xi1>
    %42 = arith.xori %38, %41 : vector<128x128xi1>
    %43 = arith.andi %42, %36 : vector<128x128xi1>
    %44 = vector.broadcast %32 : i32 to vector<128x128xi32>
    %45 = arith.addi %34, %44 : vector<128x128xi32>
    %46 = arith.select %43, %45, %34 : vector<128x128xi1>, vector<128x128xi32>
    %c15_i32 = arith.constant 15 : i32
    %47 = vector.broadcast %c15_i32 : i32 to vector<128x128xi32>
    %48 = arith.cmpi ne, %46, %47 : vector<128x128xi32>
    %49 = vector.extract_strided_slice %0 {offsets = [1, 0], sizes = [127, 128], strides = [1, 1]} : vector<128x128xf32> to vector<127x128xf32>
    %50 = vector.extract_strided_slice %0 {offsets = [0, 0], sizes = [1, 128], strides = [1, 1]} : vector<128x128xf32> to vector<1x128xf32>
    %51 = tpu.concatenate %49, %50 in 0 : vector<127x128xf32>, vector<1x128xf32> -> vector<128x128xf32>
    %52 = arith.select %48, %51, %7 : vector<128x128xi1>, vector<128x128xf32>
    %53 = arith.addf %30, %52 : vector<128x128xf32>
    %c16_i32_14 = arith.constant 16 : i32
    %54 = vector.broadcast %c16_i32_14 : i32 to vector<128x128xi32>
    %55 = arith.cmpi sge, %5, %54 : vector<128x128xi32>
    %56 = vector.extract_strided_slice %0 {offsets = [112, 0], sizes = [16, 128], strides = [1, 1]} : vector<128x128xf32> to vector<16x128xf32>
    %57 = vector.extract_strided_slice %0 {offsets = [0, 0], sizes = [112, 128], strides = [1, 1]} : vector<128x128xf32> to vector<112x128xf32>
    %58 = tpu.concatenate %56, %57 in 0 : vector<16x128xf32>, vector<112x128xf32> -> vector<128x128xf32>
    %59 = arith.select %55, %58, %7 : vector<128x128xi1>, vector<128x128xf32>
    %60 = arith.addf %53, %59 : vector<128x128xf32>
    %c112_i32 = arith.constant 112 : i32
    %61 = vector.broadcast %c112_i32 : i32 to vector<128x128xi32>
    %62 = arith.cmpi slt, %5, %61 : vector<128x128xi32>
    %63 = vector.extract_strided_slice %0 {offsets = [16, 0], sizes = [112, 128], strides = [1, 1]} : vector<128x128xf32> to vector<112x128xf32>
    %64 = vector.extract_strided_slice %0 {offsets = [0, 0], sizes = [16, 128], strides = [1, 1]} : vector<128x128xf32> to vector<16x128xf32>
    %65 = tpu.concatenate %63, %64 in 0 : vector<112x128xf32>, vector<16x128xf32> -> vector<128x128xf32>
    %66 = arith.select %62, %65, %7 : vector<128x128xi1>, vector<128x128xf32>
    %67 = arith.addf %60, %66 : vector<128x128xf32>
    %c1_i32_15 = arith.constant 1 : i32
    %68 = vector.broadcast %c1_i32_15 : i32 to vector<128x128xi32>
    %69 = arith.cmpi sge, %6, %68 : vector<128x128xi32>
    %70 = vector.extract_strided_slice %0 {offsets = [0, 127], sizes = [128, 1], strides = [1, 1]} : vector<128x128xf32> to vector<128x1xf32>
    %71 = vector.extract_strided_slice %0 {offsets = [0, 0], sizes = [128, 127], strides = [1, 1]} : vector<128x128xf32> to vector<128x127xf32>
    %72 = tpu.concatenate %70, %71 in 1 : vector<128x1xf32>, vector<128x127xf32> -> vector<128x128xf32>
    %73 = arith.select %69, %72, %7 : vector<128x128xi1>, vector<128x128xf32>
    %74 = arith.addf %67, %73 : vector<128x128xf32>
    %c126_i32 = arith.constant 126 : i32
    %75 = vector.broadcast %c126_i32 : i32 to vector<128x128xi32>
    %76 = arith.cmpi sle, %6, %75 : vector<128x128xi32>
    %77 = vector.extract_strided_slice %0 {offsets = [0, 1], sizes = [128, 127], strides = [1, 1]} : vector<128x128xf32> to vector<128x127xf32>
    %78 = vector.extract_strided_slice %0 {offsets = [0, 0], sizes = [128, 1], strides = [1, 1]} : vector<128x128xf32> to vector<128x1xf32>
    %79 = tpu.concatenate %77, %78 in 1 : vector<128x127xf32>, vector<128x1xf32> -> vector<128x128xf32>
    %80 = arith.select %76, %79, %7 : vector<128x128xi1>, vector<128x128xf32>
    %81 = arith.addf %74, %80 : vector<128x128xf32>
    %cst_16 = arith.constant 0.000000e+00 : f32
    %82 = vector.broadcast %cst_16 : f32 to vector<128x128xf32>
    %83 = arith.cmpf ogt, %81, %82 : vector<128x128xf32>
    %cst_17 = arith.constant 1.000000e+00 : f32
    %cst_18 = arith.constant 0.000000e+00 : f32
    %84 = vector.broadcast %cst_17 : f32 to vector<128x128xf32>
    %85 = vector.broadcast %cst_18 : f32 to vector<128x128xf32>
    %86 = arith.select %83, %84, %85 : vector<128x128xi1>, vector<128x128xf32>
    %87 = arith.mulf %86, %4 : vector<128x128xf32>
    %c0_19 = arith.constant 0 : index
    %88 = memref.load %arg0[%c0_19] : memref<2xf32, #tpu.memory_space<smem>>
    %c0_20 = arith.constant 0 : index
    %c0_21 = arith.constant 0 : index
    %89 = vector.load %arg3[%c0_20, %c0_21] : memref<128x128xf32, #tpu.memory_space<vmem>>, vector<128x128xf32>
    %90 = vector.broadcast %88 : f32 to vector<128x128xf32>
    %91 = arith.cmpf oge, %89, %90 : vector<128x128xf32>
    %cst_22 = arith.constant 0.000000e+00 : f32
    %92 = vector.broadcast %cst_22 : f32 to vector<128x128xf32>
    %93 = arith.select %91, %87, %92 : vector<128x128xi1>, vector<128x128xf32>
    %c1 = arith.constant 1 : index
    %94 = memref.load %arg0[%c1] : memref<2xf32, #tpu.memory_space<smem>>
    %95 = vector.shape_cast %93 : vector<128x128xf32> to vector<1x128x128xf32>
    %cst_23 = arith.constant dense<0.000000e+00> : vector<1xf32>
    %96 = vector.multi_reduction <add>, %95, %cst_23 [1, 2] : vector<1x128x128xf32> to vector<1xf32>
    %97 = vector.shape_cast %96 : vector<1xf32> to vector<1x1x1xf32>
    %98 = vector.extract %97[0, 0, 0] : f32 from vector<1x1x1xf32>
    %99 = vector.shape_cast %4 : vector<128x128xf32> to vector<1x128x128xf32>
    %cst_24 = arith.constant dense<0.000000e+00> : vector<1xf32>
    %100 = vector.multi_reduction <add>, %99, %cst_24 [1, 2] : vector<1x128x128xf32> to vector<1xf32>
    %101 = vector.shape_cast %100 : vector<1xf32> to vector<1x1x1xf32>
    %102 = vector.extract %101[0, 0, 0] : f32 from vector<1x1x1xf32>
    %cst_25 = arith.constant 9.99999996E-13 : f32
    %103 = arith.maximumf %102, %cst_25 : f32
    %104 = arith.divf %98, %103 : f32
    %105 = arith.cmpf ogt, %104, %94 : f32
    %106 = arith.subf %104, %94 : f32
    %cst_26 = arith.constant 9.99999996E-13 : f32
    %107 = arith.maximumf %104, %cst_26 : f32
    %108 = arith.divf %106, %107 : f32
    %cst_27 = arith.constant 0.000000e+00 : f32
    %109 = arith.select %105, %108, %cst_27 : f32
    %c0_28 = arith.constant 0 : index
    %c0_29 = arith.constant 0 : index
    %110 = vector.load %arg4[%c0_28, %c0_29] : memref<128x128xf32, #tpu.memory_space<vmem>>, vector<128x128xf32>
    %111 = vector.broadcast %109 : f32 to vector<128x128xf32>
    %112 = arith.cmpf oge, %110, %111 : vector<128x128xf32>
    %cst_30 = arith.constant 0.000000e+00 : f32
    %113 = vector.broadcast %cst_30 : f32 to vector<128x128xf32>
    %114 = arith.select %112, %93, %113 : vector<128x128xi1>, vector<128x128xf32>
    %115 = arith.addf %0, %114 : vector<128x128xf32>
    %c0_31 = arith.constant 0 : index
    %c0_32 = arith.constant 0 : index
    %116 = vector.load %arg5[%c0_31, %c0_32] : memref<128x128xf32, #tpu.memory_space<vmem>>, vector<128x128xf32>
    tpu.vector_store %arg5[%c0_31, %c0_32], %115 {strides = array<i32>} : memref<128x128xf32, #tpu.memory_space<vmem>>, vector<128x128xf32>,
    %117 = vector.shape_cast %115 : vector<128x128xf32> to vector<1x128x128xf32>
    %cst_33 = arith.constant dense<0.000000e+00> : vector<1xf32>
    %118 = vector.multi_reduction <add>, %117, %cst_33 [1, 2] : vector<1x128x128xf32> to vector<1xf32>
    %119 = vector.shape_cast %118 : vector<1xf32> to vector<1x1x1xf32>
    %120 = vector.extract %119[0, 0, 0] : f32 from vector<1x1x1xf32>
    %c0_34 = arith.constant 0 : index
    %121 = memref.load %arg6[%c0_34] : memref<1xf32, #tpu.memory_space<smem>>
    memref.store %120, %arg6[%c0_34] : memref<1xf32, #tpu.memory_space<smem>>
    return
  }
}

module attributes {stable_mosaic.version = 11 : i64} {
  func.func @_apply_lesion_kernel(%arg0: memref<1xf32, #tpu.memory_space<smem>>, %arg1: memref<128x128xf32, #tpu.memory_space<vmem>>, %arg2: memref<128x128xf32, #tpu.memory_space<vmem>>, %arg3: memref<128x128xf32, #tpu.memory_space<vmem>>) attributes {dimension_semantics = [], scalar_prefetch = 0 : i64, scratch_operands = 0 : i64, tpu.core_type = #tpu.core_type<tc>} {
    %c0 = arith.constant 0 : index
    %c0_0 = arith.constant 0 : index
    %0 = vector.load %arg1[%c0, %c0_0] : memref<128x128xf32, #tpu.memory_space<vmem>>, vector<128x128xf32>
    %cst = arith.constant 0.000000e+00 : f32
    %1 = vector.broadcast %cst : f32 to vector<128x128xf32>
    %2 = arith.cmpf ogt, %0, %1 : vector<128x128xf32>
    %c0_1 = arith.constant 0 : index
    %3 = memref.load %arg0[%c0_1] : memref<1xf32, #tpu.memory_space<smem>>
    %c0_2 = arith.constant 0 : index
    %c0_3 = arith.constant 0 : index
    %4 = vector.load %arg2[%c0_2, %c0_3] : memref<128x128xf32, #tpu.memory_space<vmem>>, vector<128x128xf32>
    %5 = vector.broadcast %3 : f32 to vector<128x128xf32>
    %6 = arith.select %2, %5, %4 : vector<128x128xi1>, vector<128x128xf32>
    %c0_4 = arith.constant 0 : index
    %c0_5 = arith.constant 0 : index
    %7 = vector.load %arg3[%c0_4, %c0_5] : memref<128x128xf32, #tpu.memory_space<vmem>>, vector<128x128xf32>
    tpu.vector_store %arg3[%c0_4, %c0_5], %6 {strides = array<i32>} : memref<128x128xf32, #tpu.memory_space<vmem>>, vector<128x128xf32>,
    return
  }
}

</mosaic_0001>

<llo_original>
// kernel: _insert_lesions.10
$region0: #{_insert_lesions.10}
  #allocation0 [shape = 'u32[]', space=smem, size = 0x4, offset = 0x4, fixed_abs, tag = 'smem constant byte address 0x4 - core index']
  #allocation1 [shape = 'u32[72,128]{1,0:T(1,128)}', space=vmem, size = 0x9000, scoped, tag = 'internal scratch']
  %s0 = inlined_call_operand.vmem [shape: f32[2], index: 0, kind: input, shape index: {}]
  %s1 = inlined_call_operand.vmem [shape: f32[128,128], index: 1, kind: input, shape index: {}]
  %s2 = inlined_call_operand.vmem [shape: f32[128,128], index: 2, kind: output, shape index: {}]
  %s3 = sld [smem:[#allocation0]]
  $region22: #{_insert_lesions.10} parent=0
    _
  %s5 = ssub.s32 1, %s3
  %s6 = scalar_select 0, %s5, %s3
  $region1: #{_insert_lesions.10} parent=0
    #allocation2 [shape = 'u8[512]{0}', space=smem, size = 0x200, scoped, tag = 'input window, operand 0, single buffered']
    #allocation3 [shape = 's32[1]{0}', space=sflag, size = 0x4, scoped, tag = 'scoped memory for _insert_lesions.10']
    %7 = vsyncpa [#allocation3], 0
    // Predicated region
    $region2: #{_insert_lesions.10} parent=1 // pred_check
      _
    $region3: #{_insert_lesions.10} parent=1 // pred_check_branch
      %9 = sbr.rel (0) target = $region5
    $region4: #{_insert_lesions.10} parent=1 // pred_region
      %11 = vsyncadd [#allocation3], 0
      %s13 = sshll.u32 %s0, 4
      %s14 = int_to_ptr.vmem [resolvable:$true] %s13
      %16 = dma.vmem_to_smem %s14, 16, [#allocation2], [#allocation3]
    $region5: #{_insert_lesions.10} parent=1 // pred_fallthru
      _
    // Predicated region
    $region6: #{_insert_lesions.10} parent=1 // pred_check
      _
    $region7: #{_insert_lesions.10} parent=1 // pred_check_branch
      %18 = sbr.rel (0) target = $region9
    $region8: #{_insert_lesions.10} parent=1 // pred_region
      _
    $region9: #{_insert_lesions.10} parent=1 // pred_fallthru
      _
    // Predicated region
    $region10: #{_insert_lesions.10} parent=1 // pred_check
      _
    $region11: #{_insert_lesions.10} parent=1 // pred_check_branch
      %20 = sbr.rel (0) target = $region13
    $region12: #{_insert_lesions.10} parent=1 // pred_region
      %22 = dma.done [#allocation3], 16
    $region13: #{_insert_lesions.10} parent=1 // pred_fallthru
      _
    %23 = sfence
    %v24 = vld [vmem:[%s1] sm:$0xff]
    %v25 = vld [vmem:[%s1 + $0x8] sm:$0xff]
    %v26 = vld [vmem:[%s1 + $0x10] sm:$0xff]
    %v27 = vld [vmem:[%s1 + $0x18] sm:$0xff]
    %v28 = vld [vmem:[%s1 + $0x20] sm:$0xff]
    %v29 = vld [vmem:[%s1 + $0x28] sm:$0xff]
    %v30 = vld [vmem:[%s1 + $0x30] sm:$0xff]
    %v31 = vld [vmem:[%s1 + $0x38] sm:$0xff]
    %v32 = vld [vmem:[%s1 + $0x40] sm:$0xff]
    %v33 = vld [vmem:[%s1 + $0x48] sm:$0xff]
    %v34 = vld [vmem:[%s1 + $0x50] sm:$0xff]
    %v35 = vld [vmem:[%s1 + $0x58] sm:$0xff]
    %v36 = vld [vmem:[%s1 + $0x60] sm:$0xff]
    %v37 = vld [vmem:[%s1 + $0x68] sm:$0xff]
    %v38 = vld [vmem:[%s1 + $0x70] sm:$0xff]
    %v39 = vld [vmem:[%s1 + $0x78] sm:$0xff]
    %s40 = sld [smem:[#allocation2]]
    %v41 = vstv %s40
    %vm42 = vcmp.eq.f32.partialorder %v24, %v41
    %vm43 = vcmp.eq.f32.partialorder %v25, %v41
    %vm44 = vcmp.eq.f32.partialorder %v26, %v41
    %vm45 = vcmp.eq.f32.partialorder %v27, %v41
    %vm46 = vcmp.eq.f32.partialorder %v28, %v41
    %vm47 = vcmp.eq.f32.partialorder %v29, %v41
    %vm48 = vcmp.eq.f32.partialorder %v30, %v41
    %vm49 = vcmp.eq.f32.partialorder %v31, %v41
    %vm50 = vcmp.eq.f32.partialorder %v32, %v41
    %vm51 = vcmp.eq.f32.partialorder %v33, %v41
    %vm52 = vcmp.eq.f32.partialorder %v34, %v41
    %vm53 = vcmp.eq.f32.partialorder %v35, %v41
    %vm54 = vcmp.eq.f32.partialorder %v36, %v41
    %vm55 = vcmp.eq.f32.partialorder %v37, %v41
    %vm56 = vcmp.eq.f32.partialorder %v38, %v41
    %vm57 = vcmp.eq.f32.partialorder %v39, %v41
    %v58 = vsel %vm42, 1.0, 0.0
    %v59 = vsel %vm43, 1.0, 0.0
    %v60 = vsel %vm44, 1.0, 0.0
    %v61 = vsel %vm45, 1.0, 0.0
    %v62 = vsel %vm46, 1.0, 0.0
    %v63 = vsel %vm47, 1.0, 0.0
    %v64 = vsel %vm48, 1.0, 0.0
    %v65 = vsel %vm49, 1.0, 0.0
    %v66 = vsel %vm50, 1.0, 0.0
    %v67 = vsel %vm51, 1.0, 0.0
    %v68 = vsel %vm52, 1.0, 0.0
    %v69 = vsel %vm53, 1.0, 0.0
    %v70 = vsel %vm54, 1.0, 0.0
    %v71 = vsel %vm55, 1.0, 0.0
    %v72 = vsel %vm56, 1.0, 0.0
    %v73 = vsel %vm57, 1.0, 0.0
    %s74 = sld [smem:[#allocation2 + $0x1]]
    %v75 = vstv %s74
    %vm76 = vcmp.eq.f32.partialorder %v24, %v75
    %vm77 = vcmp.eq.f32.partialorder %v25, %v75
    %vm78 = vcmp.eq.f32.partialorder %v26, %v75
    %vm79 = vcmp.eq.f32.partialorder %v27, %v75
    %vm80 = vcmp.eq.f32.partialorder %v28, %v75
    %vm81 = vcmp.eq.f32.partialorder %v29, %v75
    %vm82 = vcmp.eq.f32.partialorder %v30, %v75
    %vm83 = vcmp.eq.f32.partialorder %v31, %v75
    %vm84 = vcmp.eq.f32.partialorder %v32, %v75
    %vm85 = vcmp.eq.f32.partialorder %v33, %v75
    %vm86 = vcmp.eq.f32.partialorder %v34, %v75
    %vm87 = vcmp.eq.f32.partialorder %v35, %v75
    %vm88 = vcmp.eq.f32.partialorder %v36, %v75
    %vm89 = vcmp.eq.f32.partialorder %v37, %v75
    %vm90 = vcmp.eq.f32.partialorder %v38, %v75
    %vm91 = vcmp.eq.f32.partialorder %v39, %v75
    %v92 = vsel %vm76, 1.0, %v58
    %v93 = vsel %vm77, 1.0, %v59
    %v94 = vsel %vm78, 1.0, %v60
    %v95 = vsel %vm79, 1.0, %v61
    %v96 = vsel %vm80, 1.0, %v62
    %v97 = vsel %vm81, 1.0, %v63
    %v98 = vsel %vm82, 1.0, %v64
    %v99 = vsel %vm83, 1.0, %v65
    %v100 = vsel %vm84, 1.0, %v66
    %v101 = vsel %vm85, 1.0, %v67
    %v102 = vsel %vm86, 1.0, %v68
    %v103 = vsel %vm87, 1.0, %v69
    %v104 = vsel %vm88, 1.0, %v70
    %v105 = vsel %vm89, 1.0, %v71
    %v106 = vsel %vm90, 1.0, %v72
    %v107 = vsel %vm91, 1.0, %v73
    %108 = vst [vmem:[%s2] sm:$0xff] %v92
    %109 = vst [vmem:[%s2 + $0x8] sm:$0xff] %v93
    %110 = vst [vmem:[%s2 + $0x10] sm:$0xff] %v94
    %111 = vst [vmem:[%s2 + $0x18] sm:$0xff] %v95
    %112 = vst [vmem:[%s2 + $0x20] sm:$0xff] %v96
    %113 = vst [vmem:[%s2 + $0x28] sm:$0xff] %v97
    %114 = vst [vmem:[%s2 + $0x30] sm:$0xff] %v98
    %115 = vst [vmem:[%s2 + $0x38] sm:$0xff] %v99
    %116 = vst [vmem:[%s2 + $0x40] sm:$0xff] %v100
    %117 = vst [vmem:[%s2 + $0x48] sm:$0xff] %v101
    %118 = vst [vmem:[%s2 + $0x50] sm:$0xff] %v102
    %119 = vst [vmem:[%s2 + $0x58] sm:$0xff] %v103
    %120 = vst [vmem:[%s2 + $0x60] sm:$0xff] %v104
    %121 = vst [vmem:[%s2 + $0x68] sm:$0xff] %v105
    %122 = vst [vmem:[%s2 + $0x70] sm:$0xff] %v106
    %123 = vst [vmem:[%s2 + $0x78] sm:$0xff] %v107
    // Predicated region
    $region14: #{_insert_lesions.10} parent=1 // pred_check
      _
    $region15: #{_insert_lesions.10} parent=1 // pred_check_branch
      %125 = sbr.rel (0) target = $region17
    $region16: #{_insert_lesions.10} parent=1 // pred_region
      _
    $region17: #{_insert_lesions.10} parent=1 // pred_fallthru
      _
    // Predicated region
    $region18: #{_insert_lesions.10} parent=1 // pred_check
      _
    $region19: #{_insert_lesions.10} parent=1 // pred_check_branch
      %127 = sbr.rel (0) target = $region21
    $region20: #{_insert_lesions.10} parent=1 // pred_region
      _
    $region21: #{_insert_lesions.10} parent=1 // pred_fallthru
      _
    %128 = vsyncpa [#allocation3], 1

// kernel: _insert_lesions.12
$region0: #{_insert_lesions.12}
  #allocation0 [shape = 'u32[]', space=smem, size = 0x4, offset = 0x4, fixed_abs, tag = 'smem constant byte address 0x4 - core index']
  #allocation1 [shape = 'u32[72,128]{1,0:T(1,128)}', space=vmem, size = 0x9000, scoped, tag = 'internal scratch']
  %s0 = inlined_call_operand.vmem [shape: f32[128,128], index: 0, kind: input, shape index: {}]
  %s1 = inlined_call_operand.vmem [shape: f32[128,128], index: 1, kind: input, shape index: {}]
  %s2 = inlined_call_operand.hbm [shape: f32[1], index: 2, kind: output, shape index: {}]
  %s3 = sld [smem:[#allocation0]]
  $region18: #{_insert_lesions.12} parent=0
    _
  %s5 = ssub.s32 1, %s3
  %s6 = scalar_select 0, %s5, %s3
  $region1: #{_insert_lesions.12} parent=0
    #allocation2 [shape = 'u8[512]{0}', space=smem, size = 0x200, scoped, tag = 'output window, operand 0, single buffered']
    #allocation3 [shape = 's32[1]{0}', space=sflag, size = 0x4, scoped, tag = 'scoped memory for _insert_lesions.12']
    %7 = vsyncpa [#allocation3], 0
    // Predicated region
    $region2: #{_insert_lesions.12} parent=1 // pred_check
      _
    $region3: #{_insert_lesions.12} parent=1 // pred_check_branch
      %9 = sbr.rel (0) target = $region5
    $region4: #{_insert_lesions.12} parent=1 // pred_region
      _
    $region5: #{_insert_lesions.12} parent=1 // pred_fallthru
      _
    // Predicated region
    $region6: #{_insert_lesions.12} parent=1 // pred_check
      _
    $region7: #{_insert_lesions.12} parent=1 // pred_check_branch
      %11 = sbr.rel (0) target = $region9
    $region8: #{_insert_lesions.12} parent=1 // pred_region
      _
    $region9: #{_insert_lesions.12} parent=1 // pred_fallthru
      _
    %v12 = vld [vmem:[%s0] sm:$0xff]
    %v13 = vld [vmem:[%s0 + $0x8] sm:$0xff]
    %v14 = vld [vmem:[%s0 + $0x10] sm:$0xff]
    %v15 = vld [vmem:[%s0 + $0x18] sm:$0xff]
    %v16 = vld [vmem:[%s0 + $0x20] sm:$0xff]
    %v17 = vld [vmem:[%s0 + $0x28] sm:$0xff]
    %v18 = vld [vmem:[%s0 + $0x30] sm:$0xff]
    %v19 = vld [vmem:[%s0 + $0x38] sm:$0xff]
    %v20 = vld [vmem:[%s0 + $0x40] sm:$0xff]
    %v21 = vld [vmem:[%s0 + $0x48] sm:$0xff]
    %v22 = vld [vmem:[%s0 + $0x50] sm:$0xff]
    %v23 = vld [vmem:[%s0 + $0x58] sm:$0xff]
    %v24 = vld [vmem:[%s0 + $0x60] sm:$0xff]
    %v25 = vld [vmem:[%s0 + $0x68] sm:$0xff]
    %v26 = vld [vmem:[%s0 + $0x70] sm:$0xff]
    %v27 = vld [vmem:[%s0 + $0x78] sm:$0xff]
    %v28 = vlaneseq
    %v29 = vshrl.u32 %v28, 7
    %v30 = vadd.s32 %v29, 8
    %v31 = vadd.s32 %v29, 16
    %v32 = vadd.s32 %v29, 24
    %v33 = vadd.s32 %v29, 32
    %v34 = vadd.s32 %v29, 40
    %v35 = vadd.s32 %v29, 48
    %v36 = vadd.s32 %v29, 56
    %v37 = vadd.s32 %v29, 64
    %v38 = vadd.s32 %v29, 72
    %v39 = vadd.s32 %v29, 80
    %v40 = vadd.s32 %v29, 88
    %v41 = vadd.s32 %v29, 96
    %v42 = vadd.s32 %v29, 104
    %v43 = vadd.s32 %v29, 112
    %v44 = vadd.s32 %v29, 120
    %v45 = vlaneseq
    %v46 = vand.u32 %v45, 127
    %vm47 = vcmp.lt.s32.totalorder %v29, 0
    %v48 = vsub.s32 0, %v29
    %v49 = vsel %vm47, %v48, %v29
    %v50 = vshrl.u32 %v49, 4
    %v51 = vand.u32 %v49, 15
    %v52 = vsub.s32 0, %v51
    %v53 = vsel %vm47, %v52, %v51
    %vm54 = vcmp.lt.s32.totalorder %v30, 0
    %v55 = vsub.s32 0, %v30
    %v56 = vsel %vm54, %v55, %v30
    %v57 = vshrl.u32 %v56, 4
    %v58 = vand.u32 %v56, 15
    %v59 = vsub.s32 0, %v58
    %v60 = vsel %vm54, %v59, %v58
    %vm61 = vcmp.lt.s32.totalorder %v31, 0
    %v62 = vsub.s32 0, %v31
    %v63 = vsel %vm61, %v62, %v31
    %v64 = vshrl.u32 %v63, 4
    %v65 = vand.u32 %v63, 15
    %v66 = vsub.s32 0, %v65
    %v67 = vsel %vm61, %v66, %v65
    %vm68 = vcmp.lt.s32.totalorder %v32, 0
    %v69 = vsub.s32 0, %v32
    %v70 = vsel %vm68, %v69, %v32
    %v71 = vshrl.u32 %v70, 4
    %v72 = vand.u32 %v70, 15
    %v73 = vsub.s32 0, %v72
    %v74 = vsel %vm68, %v73, %v72
    %vm75 = vcmp.lt.s32.totalorder %v33, 0
    %v76 = vsub.s32 0, %v33
    %v77 = vsel %vm75, %v76, %v33
    %v78 = vshrl.u32 %v77, 4
    %v79 = vand.u32 %v77, 15
    %v80 = vsub.s32 0, %v79
    %v81 = vsel %vm75, %v80, %v79
    %vm82 = vcmp.lt.s32.totalorder %v34, 0
    %v83 = vsub.s32 0, %v34
    %v84 = vsel %vm82, %v83, %v34
    %v85 = vshrl.u32 %v84, 4
    %v86 = vand.u32 %v84, 15
    %v87 = vsub.s32 0, %v86
    %v88 = vsel %vm82, %v87, %v86
    %vm89 = vcmp.lt.s32.totalorder %v35, 0
    %v90 = vsub.s32 0, %v35
    %v91 = vsel %vm89, %v90, %v35
    %v92 = vshrl.u32 %v91, 4
    %v93 = vand.u32 %v91, 15
    %v94 = vsub.s32 0, %v93
    %v95 = vsel %vm89, %v94, %v93
    %vm96 = vcmp.lt.s32.totalorder %v36, 0
    %v97 = vsub.s32 0, %v36
    %v98 = vsel %vm96, %v97, %v36
    %v99 = vshrl.u32 %v98, 4
    %v100 = vand.u32 %v98, 15
    %v101 = vsub.s32 0, %v100
    %v102 = vsel %vm96, %v101, %v100
    %vm103 = vcmp.lt.s32.totalorder %v37, 0
    %v104 = vsub.s32 0, %v37
    %v105 = vsel %vm103, %v104, %v37
    %v106 = vshrl.u32 %v105, 4
    %v107 = vand.u32 %v105, 15
    %v108 = vsub.s32 0, %v107
    %v109 = vsel %vm103, %v108, %v107
    %vm110 = vcmp.lt.s32.totalorder %v38, 0
    %v111 = vsub.s32 0, %v38
    %v112 = vsel %vm110, %v111, %v38
    %v113 = vshrl.u32 %v112, 4
    %v114 = vand.u32 %v112, 15
    %v115 = vsub.s32 0, %v114
    %v116 = vsel %vm110, %v115, %v114
    %vm117 = vcmp.lt.s32.totalorder %v39, 0
    %v118 = vsub.s32 0, %v39
    %v119 = vsel %vm117, %v118, %v39
    %v120 = vshrl.u32 %v119, 4
    %v121 = vand.u32 %v119, 15
    %v122 = vsub.s32 0, %v121
    %v123 = vsel %vm117, %v122, %v121
    %vm124 = vcmp.lt.s32.totalorder %v40, 0
    %v125 = vsub.s32 0, %v40
    %v126 = vsel %vm124, %v125, %v40
    %v127 = vshrl.u32 %v126, 4
    %v128 = vand.u32 %v126, 15
    %v129 = vsub.s32 0, %v128
    %v130 = vsel %vm124, %v129, %v128
    %vm131 = vcmp.lt.s32.totalorder %v41, 0
    %v132 = vsub.s32 0, %v41
    %v133 = vsel %vm131, %v132, %v41
    %v134 = vshrl.u32 %v133, 4
    %v135 = vand.u32 %v133, 15
    %v136 = vsub.s32 0, %v135
    %v137 = vsel %vm131, %v136, %v135
    %vm138 = vcmp.lt.s32.totalorder %v42, 0
    %v139 = vsub.s32 0, %v42
    %v140 = vsel %vm138, %v139, %v42
    %v141 = vshrl.u32 %v140, 4
    %v142 = vand.u32 %v140, 15
    %v143 = vsub.s32 0, %v142
    %v144 = vsel %vm138, %v143, %v142
    %vm145 = vcmp.lt.s32.totalorder %v43, 0
    %v146 = vsub.s32 0, %v43
    %v147 = vsel %vm145, %v146, %v43
    %v148 = vshrl.u32 %v147, 4
    %v149 = vand.u32 %v147, 15
    %v150 = vsub.s32 0, %v149
    %v151 = vsel %vm145, %v150, %v149
    %vm152 = vcmp.lt.s32.totalorder %v44, 0
    %v153 = vsub.s32 0, %v44
    %v154 = vsel %vm152, %v153, %v44
    %v155 = vshrl.u32 %v154, 4
    %v156 = vand.u32 %v154, 15
    %v157 = vsub.s32 0, %v156
    %v158 = vsel %vm152, %v157, %v156
    %vm159 = vcmp.ne.s32.totalorder %v53, 0
    %vm160 = vcmp.ne.s32.totalorder %v60, 0
    %vm161 = vcmp.ne.s32.totalorder %v67, 0
    %vm162 = vcmp.ne.s32.totalorder %v74, 0
    %vm163 = vcmp.ne.s32.totalorder %v81, 0
    %vm164 = vcmp.ne.s32.totalorder %v88, 0
    %vm165 = vcmp.ne.s32.totalorder %v95, 0
    %vm166 = vcmp.ne.s32.totalorder %v102, 0
    %vm167 = vcmp.ne.s32.totalorder %v109, 0
    %vm168 = vcmp.ne.s32.totalorder %v116, 0
    %vm169 = vcmp.ne.s32.totalorder %v123, 0
    %vm170 = vcmp.ne.s32.totalorder %v130, 0
    %vm171 = vcmp.ne.s32.totalorder %v137, 0
    %vm172 = vcmp.ne.s32.totalorder %v144, 0
    %vm173 = vcmp.ne.s32.totalorder %v151, 0
    %vm174 = vcmp.ne.s32.totalorder %v158, 0
    %vm175 = vcmp.lt.s32.totalorder %v53, 0
    %vm176 = vcmp.lt.s32.totalorder %v60, 0
    %vm177 = vcmp.lt.s32.totalorder %v67, 0
    %vm178 = vcmp.lt.s32.totalorder %v74, 0
    %vm179 = vcmp.lt.s32.totalorder %v81, 0
    %vm180 = vcmp.lt.s32.totalorder %v88, 0
    %vm181 = vcmp.lt.s32.totalorder %v95, 0
    %vm182 = vcmp.lt.s32.totalorder %v102, 0
    %vm183 = vcmp.lt.s32.totalorder %v109, 0
    %vm184 = vcmp.lt.s32.totalorder %v116, 0
    %vm185 = vcmp.lt.s32.totalorder %v123, 0
    %vm186 = vcmp.lt.s32.totalorder %v130, 0
    %vm187 = vcmp.lt.s32.totalorder %v137, 0
    %vm188 = vcmp.lt.s32.totalorder %v144, 0
    %vm189 = vcmp.lt.s32.totalorder %v151, 0
    %vm190 = vcmp.lt.s32.totalorder %v158, 0
    %vm191 = vmand %vm175, %vm159
    %vm192 = vmand %vm176, %vm160
    %vm193 = vmand %vm177, %vm161
    %vm194 = vmand %vm178, %vm162
    %vm195 = vmand %vm179, %vm163
    %vm196 = vmand %vm180, %vm164
    %vm197 = vmand %vm181, %vm165
    %vm198 = vmand %vm182, %vm166
    %vm199 = vmand %vm183, %vm167
    %vm200 = vmand %vm184, %vm168
    %vm201 = vmand %vm185, %vm169
    %vm202 = vmand %vm186, %vm170
    %vm203 = vmand %vm187, %vm171
    %vm204 = vmand %vm188, %vm172
    %vm205 = vmand %vm189, %vm173
    %vm206 = vmand %vm190, %vm174
    %v207 = vadd.s32 %v53, 16
    %v208 = vadd.s32 %v60, 16
    %v209 = vadd.s32 %v67, 16
    %v210 = vadd.s32 %v74, 16
    %v211 = vadd.s32 %v81, 16
    %v212 = vadd.s32 %v88, 16
    %v213 = vadd.s32 %v95, 16
    %v214 = vadd.s32 %v102, 16
    %v215 = vadd.s32 %v109, 16
    %v216 = vadd.s32 %v116, 16
    %v217 = vadd.s32 %v123, 16
    %v218 = vadd.s32 %v130, 16
    %v219 = vadd.s32 %v137, 16
    %v220 = vadd.s32 %v144, 16
    %v221 = vadd.s32 %v151, 16
    %v222 = vadd.s32 %v158, 16
    %v223 = vsel %vm191, %v207, %v53
    %v224 = vsel %vm192, %v208, %v60
    %v225 = vsel %vm193, %v209, %v67
    %v226 = vsel %vm194, %v210, %v74
    %v227 = vsel %vm195, %v211, %v81
    %v228 = vsel %vm196, %v212, %v88
    %v229 = vsel %vm197, %v213, %v95
    %v230 = vsel %vm198, %v214, %v102
    %v231 = vsel %vm199, %v215, %v109
    %v232 = vsel %vm200, %v216, %v116
    %v233 = vsel %vm201, %v217, %v123
    %v234 = vsel %vm202, %v218, %v130
    %v235 = vsel %vm203, %v219, %v137
    %v236 = vsel %vm204, %v220, %v144
    %v237 = vsel %vm205, %v221, %v151
    %v238 = vsel %vm206, %v222, %v158
    %vm239 = vcmp.ne.s32.totalorder %v223, 0
    %vm240 = vcmp.ne.s32.totalorder %v224, 0
    %vm241 = vcmp.ne.s32.totalorder %v225, 0
    %vm242 = vcmp.ne.s32.totalorder %v226, 0
    %vm243 = vcmp.ne.s32.totalorder %v227, 0
    %vm244 = vcmp.ne.s32.totalorder %v228, 0
    %vm245 = vcmp.ne.s32.totalorder %v229, 0
    %vm246 = vcmp.ne.s32.totalorder %v230, 0
    %vm247 = vcmp.ne.s32.totalorder %v231, 0
    %vm248 = vcmp.ne.s32.totalorder %v232, 0
    %vm249 = vcmp.ne.s32.totalorder %v233, 0
    %vm250 = vcmp.ne.s32.totalorder %v234, 0
    %vm251 = vcmp.ne.s32.totalorder %v235, 0
    %vm252 = vcmp.ne.s32.totalorder %v236, 0
    %vm253 = vcmp.ne.s32.totalorder %v237, 0
    %vm254 = vcmp.ne.s32.totalorder %v238, 0
    %v256 = vrot.slane %v27, 7
    %vm273 = vcmask 1040384
    %v274 = vrot.slane %v12, 7
    %v275 = vrot.slane %v13, 7
    %v276 = vsel %vm273, %v274, %v275
    %v277 = vrot.slane %v14, 7
    %v278 = vsel %vm273, %v275, %v277
    %v279 = vrot.slane %v15, 7
    %v280 = vsel %vm273, %v277, %v279
    %v281 = vrot.slane %v16, 7
    %v282 = vsel %vm273, %v279, %v281
    %v283 = vrot.slane %v17, 7
    %v284 = vsel %vm273, %v281, %v283
    %v285 = vrot.slane %v18, 7
    %v286 = vsel %vm273, %v283, %v285
    %v287 = vrot.slane %v19, 7
    %v288 = vsel %vm273, %v285, %v287
    %v289 = vrot.slane %v20, 7
    %v290 = vsel %vm273, %v287, %v289
    %v291 = vrot.slane %v21, 7
    %v292 = vsel %vm273, %v289, %v291
    %v293 = vrot.slane %v22, 7
    %v294 = vsel %vm273, %v291, %v293
    %v295 = vrot.slane %v23, 7
    %v296 = vsel %vm273, %v293, %v295
    %v297 = vrot.slane %v24, 7
    %v298 = vsel %vm273, %v295, %v297
    %v299 = vrot.slane %v25, 7
    %v300 = vsel %vm273, %v297, %v299
    %v301 = vrot.slane %v26, 7
    %v302 = vsel %vm273, %v299, %v301
    %v303 = vsel %vm273, %v301, %v256
    %v320 = vsel %vm273, %v256, %v274
    %v321 = vsel %vm239, %v320, 0.0
    %v322 = vsel %vm240, %v276, 0.0
    %v323 = vsel %vm241, %v278, 0.0
    %v324 = vsel %vm242, %v280, 0.0
    %v325 = vsel %vm243, %v282, 0.0
    %v326 = vsel %vm244, %v284, 0.0
    %v327 = vsel %vm245, %v286, 0.0
    %v328 = vsel %vm246, %v288, 0.0
    %v329 = vsel %vm247, %v290, 0.0
    %v330 = vsel %vm248, %v292, 0.0
    %v331 = vsel %vm249, %v294, 0.0
    %v332 = vsel %vm250, %v296, 0.0
    %v333 = vsel %vm251, %v298, 0.0
    %v334 = vsel %vm252, %v300, 0.0
    %v335 = vsel %vm253, %v302, 0.0
    %v336 = vsel %vm254, %v303, 0.0
    %v337 = vadd.f32 %v12, %v321
    %v338 = vadd.f32 %v13, %v322
    %v339 = vadd.f32 %v14, %v323
    %v340 = vadd.f32 %v15, %v324
    %v341 = vadd.f32 %v16, %v325
    %v342 = vadd.f32 %v17, %v326
    %v343 = vadd.f32 %v18, %v327
    %v344 = vadd.f32 %v19, %v328
    %v345 = vadd.f32 %v20, %v329
    %v346 = vadd.f32 %v21, %v330
    %v347 = vadd.f32 %v22, %v331
    %v348 = vadd.f32 %v23, %v332
    %v349 = vadd.f32 %v24, %v333
    %v350 = vadd.f32 %v25, %v334
    %v351 = vadd.f32 %v26, %v335
    %v352 = vadd.f32 %v27, %v336
    %vm353 = vcmp.ne.s32.totalorder %v223, 15
    %vm354 = vcmp.ne.s32.totalorder %v224, 15
    %vm355 = vcmp.ne.s32.totalorder %v225, 15
    %vm356 = vcmp.ne.s32.totalorder %v226, 15
    %vm357 = vcmp.ne.s32.totalorder %v227, 15
    %vm358 = vcmp.ne.s32.totalorder %v228, 15
    %vm359 = vcmp.ne.s32.totalorder %v229, 15
    %vm360 = vcmp.ne.s32.totalorder %v230, 15
    %vm361 = vcmp.ne.s32.totalorder %v231, 15
    %vm362 = vcmp.ne.s32.totalorder %v232, 15
    %vm363 = vcmp.ne.s32.totalorder %v233, 15
    %vm364 = vcmp.ne.s32.totalorder %v234, 15
    %vm365 = vcmp.ne.s32.totalorder %v235, 15
    %vm366 = vcmp.ne.s32.totalorder %v236, 15
    %vm367 = vcmp.ne.s32.totalorder %v237, 15
    %vm368 = vcmp.ne.s32.totalorder %v238, 15
    %vm369 = vcmask 1046528
    %v370 = vrot.slane %v12, 1
    %v371 = vrot.slane %v13, 1
    %v372 = vsel %vm369, %v370, %v371
    %v373 = vrot.slane %v14, 1
    %v374 = vsel %vm369, %v371, %v373
    %v375 = vrot.slane %v15, 1
    %v376 = vsel %vm369, %v373, %v375
    %v377 = vrot.slane %v16, 1
    %v378 = vsel %vm369, %v375, %v377
    %v379 = vrot.slane %v17, 1
    %v380 = vsel %vm369, %v377, %v379
    %v381 = vrot.slane %v18, 1
    %v382 = vsel %vm369, %v379, %v381
    %v383 = vrot.slane %v19, 1
    %v384 = vsel %vm369, %v381, %v383
    %v385 = vrot.slane %v20, 1
    %v386 = vsel %vm369, %v383, %v385
    %v387 = vrot.slane %v21, 1
    %v388 = vsel %vm369, %v385, %v387
    %v389 = vrot.slane %v22, 1
    %v390 = vsel %vm369, %v387, %v389
    %v391 = vrot.slane %v23, 1
    %v392 = vsel %vm369, %v389, %v391
    %v393 = vrot.slane %v24, 1
    %v394 = vsel %vm369, %v391, %v393
    %v395 = vrot.slane %v25, 1
    %v396 = vsel %vm369, %v393, %v395
    %v397 = vrot.slane %v26, 1
    %v398 = vsel %vm369, %v395, %v397
    %v399 = vrot.slane %v27, 1
    %v400 = vsel %vm369, %v397, %v399
    %v418 = vsel %vm369, %v399, %v370
    %v419 = vsel %vm353, %v372, 0.0
    %v420 = vsel %vm354, %v374, 0.0
    %v421 = vsel %vm355, %v376, 0.0
    %v422 = vsel %vm356, %v378, 0.0
    %v423 = vsel %vm357, %v380, 0.0
    %v424 = vsel %vm358, %v382, 0.0
    %v425 = vsel %vm359, %v384, 0.0
    %v426 = vsel %vm360, %v386, 0.0
    %v427 = vsel %vm361, %v388, 0.0
    %v428 = vsel %vm362, %v390, 0.0
    %v429 = vsel %vm363, %v392, 0.0
    %v430 = vsel %vm364, %v394, 0.0
    %v431 = vsel %vm365, %v396, 0.0
    %v432 = vsel %vm366, %v398, 0.0
    %v433 = vsel %vm367, %v400, 0.0
    %v434 = vsel %vm368, %v418, 0.0
    %v435 = vadd.f32 %v337, %v419
    %v436 = vadd.f32 %v338, %v420
    %v437 = vadd.f32 %v339, %v421
    %v438 = vadd.f32 %v340, %v422
    %v439 = vadd.f32 %v341, %v423
    %v440 = vadd.f32 %v342, %v424
    %v441 = vadd.f32 %v343, %v425
    %v442 = vadd.f32 %v344, %v426
    %v443 = vadd.f32 %v345, %v427
    %v444 = vadd.f32 %v346, %v428
    %v445 = vadd.f32 %v347, %v429
    %v446 = vadd.f32 %v348, %v430
    %v447 = vadd.f32 %v349, %v431
    %v448 = vadd.f32 %v350, %v432
    %v449 = vadd.f32 %v351, %v433
    %v450 = vadd.f32 %v352, %v434
    %vm451 = vcmp.ge.s32.totalorder %v29, 16
    %vm452 = vcmp.ge.s32.totalorder %v30, 16
    %vm453 = vcmp.ge.s32.totalorder %v31, 16
    %vm454 = vcmp.ge.s32.totalorder %v32, 16
    %vm455 = vcmp.ge.s32.totalorder %v33, 16
    %vm456 = vcmp.ge.s32.totalorder %v34, 16
    %vm457 = vcmp.ge.s32.totalorder %v35, 16
    %vm458 = vcmp.ge.s32.totalorder %v36, 16
    %vm459 = vcmp.ge.s32.totalorder %v37, 16
    %vm460 = vcmp.ge.s32.totalorder %v38, 16
    %vm461 = vcmp.ge.s32.totalorder %v39, 16
    %vm462 = vcmp.ge.s32.totalorder %v40, 16
    %vm463 = vcmp.ge.s32.totalorder %v41, 16
    %vm464 = vcmp.ge.s32.totalorder %v42, 16
    %vm465 = vcmp.ge.s32.totalorder %v43, 16
    %vm466 = vcmp.ge.s32.totalorder %v44, 16
    %v467 = vsel %vm451, %v26, 0.0
    %v468 = vsel %vm452, %v27, 0.0
    %v469 = vsel %vm453, %v12, 0.0
    %v470 = vsel %vm454, %v13, 0.0
    %v471 = vsel %vm455, %v14, 0.0
    %v472 = vsel %vm456, %v15, 0.0
    %v473 = vsel %vm457, %v16, 0.0
    %v474 = vsel %vm458, %v17, 0.0
    %v475 = vsel %vm459, %v18, 0.0
    %v476 = vsel %vm460, %v19, 0.0
    %v477 = vsel %vm461, %v20, 0.0
    %v478 = vsel %vm462, %v21, 0.0
    %v479 = vsel %vm463, %v22, 0.0
    %v480 = vsel %vm464, %v23, 0.0
    %v481 = vsel %vm465, %v24, 0.0
    %v482 = vsel %vm466, %v25, 0.0
    %v483 = vadd.f32 %v435, %v467
    %v484 = vadd.f32 %v436, %v468
    %v485 = vadd.f32 %v437, %v469
    %v486 = vadd.f32 %v438, %v470
    %v487 = vadd.f32 %v439, %v471
    %v488 = vadd.f32 %v440, %v472
    %v489 = vadd.f32 %v441, %v473
    %v490 = vadd.f32 %v442, %v474
    %v491 = vadd.f32 %v443, %v475
    %v492 = vadd.f32 %v444, %v476
    %v493 = vadd.f32 %v445, %v477
    %v494 = vadd.f32 %v446, %v478
    %v495 = vadd.f32 %v447, %v479
    %v496 = vadd.f32 %v448, %v480
    %v497 = vadd.f32 %v449, %v481
    %v498 = vadd.f32 %v450, %v482
    %vm499 = vcmp.lt.s32.totalorder %v29, 112
    %vm500 = vcmp.lt.s32.totalorder %v30, 112
    %vm501 = vcmp.lt.s32.totalorder %v31, 112
    %vm502 = vcmp.lt.s32.totalorder %v32, 112
    %vm503 = vcmp.lt.s32.totalorder %v33, 112
    %vm504 = vcmp.lt.s32.totalorder %v34, 112
    %vm505 = vcmp.lt.s32.totalorder %v35, 112
    %vm506 = vcmp.lt.s32.totalorder %v36, 112
    %vm507 = vcmp.lt.s32.totalorder %v37, 112
    %vm508 = vcmp.lt.s32.totalorder %v38, 112
    %vm509 = vcmp.lt.s32.totalorder %v39, 112
    %vm510 = vcmp.lt.s32.totalorder %v40, 112
    %vm511 = vcmp.lt.s32.totalorder %v41, 112
    %vm512 = vcmp.lt.s32.totalorder %v42, 112
    %vm513 = vcmp.lt.s32.totalorder %v43, 112
    %vm514 = vcmp.lt.s32.totalorder %v44, 112
    %v515 = vsel %vm499, %v14, 0.0
    %v516 = vsel %vm500, %v15, 0.0
    %v517 = vsel %vm501, %v16, 0.0
    %v518 = vsel %vm502, %v17, 0.0
    %v519 = vsel %vm503, %v18, 0.0
    %v520 = vsel %vm504, %v19, 0.0
    %v521 = vsel %vm505, %v20, 0.0
    %v522 = vsel %vm506, %v21, 0.0
    %v523 = vsel %vm507, %v22, 0.0
    %v524 = vsel %vm508, %v23, 0.0
    %v525 = vsel %vm509, %v24, 0.0
    %v526 = vsel %vm510, %v25, 0.0
    %v527 = vsel %vm511, %v26, 0.0
    %v528 = vsel %vm512, %v27, 0.0
    %v529 = vsel %vm513, %v12, 0.0
    %v530 = vsel %vm514, %v13, 0.0
    %v531 = vadd.f32 %v483, %v515
    %v532 = vadd.f32 %v484, %v516
    %v533 = vadd.f32 %v485, %v517
    %v534 = vadd.f32 %v486, %v518
    %v535 = vadd.f32 %v487, %v519
    %v536 = vadd.f32 %v488, %v520
    %v537 = vadd.f32 %v489, %v521
    %v538 = vadd.f32 %v490, %v522
    %v539 = vadd.f32 %v491, %v523
    %v540 = vadd.f32 %v492, %v524
    %v541 = vadd.f32 %v493, %v525
    %v542 = vadd.f32 %v494, %v526
    %v543 = vadd.f32 %v495, %v527
    %v544 = vadd.f32 %v496, %v528
    %v545 = vadd.f32 %v497, %v529
    %v546 = vadd.f32 %v498, %v530
    %vm547 = vcmp.ge.s32.totalorder %v46, 1
    %548 = vrot.lane.b32.xlu0 %v12, 1
    %v549 = vpop.permute.xlu0 %548
    %550 = vrot.lane.b32.xlu0 %v13, 1
    %v551 = vpop.permute.xlu0 %550
    %552 = vrot.lane.b32.xlu0 %v14, 1
    %v553 = vpop.permute.xlu0 %552
    %554 = vrot.lane.b32.xlu0 %v15, 1
    %v555 = vpop.permute.xlu0 %554
    %556 = vrot.lane.b32.xlu0 %v16, 1
    %v557 = vpop.permute.xlu0 %556
    %558 = vrot.lane.b32.xlu0 %v17, 1
    %v559 = vpop.permute.xlu0 %558
    %560 = vrot.lane.b32.xlu0 %v18, 1
    %v561 = vpop.permute.xlu0 %560
    %562 = vrot.lane.b32.xlu0 %v19, 1
    %v563 = vpop.permute.xlu0 %562
    %564 = vrot.lane.b32.xlu0 %v20, 1
    %v565 = vpop.permute.xlu0 %564
    %566 = vrot.lane.b32.xlu0 %v21, 1
    %v567 = vpop.permute.xlu0 %566
    %568 = vrot.lane.b32.xlu0 %v22, 1
    %v569 = vpop.permute.xlu0 %568
    %570 = vrot.lane.b32.xlu0 %v23, 1
    %v571 = vpop.permute.xlu0 %570
    %572 = vrot.lane.b32.xlu0 %v24, 1
    %v573 = vpop.permute.xlu0 %572
    %574 = vrot.lane.b32.xlu0 %v25, 1
    %v575 = vpop.permute.xlu0 %574
    %576 = vrot.lane.b32.xlu0 %v26, 1
    %v577 = vpop.permute.xlu0 %576
    %578 = vrot.lane.b32.xlu0 %v27, 1
    %v579 = vpop.permute.xlu0 %578
    %v596 = vsel %vm547, %v549, 0.0
    %v597 = vsel %vm547, %v551, 0.0
    %v598 = vsel %vm547, %v553, 0.0
    %v599 = vsel %vm547, %v555, 0.0
    %v600 = vsel %vm547, %v557, 0.0
    %v601 = vsel %vm547, %v559, 0.0
    %v602 = vsel %vm547, %v561, 0.0
    %v603 = vsel %vm547, %v563, 0.0
    %v604 = vsel %vm547, %v565, 0.0
    %v605 = vsel %vm547, %v567, 0.0
    %v606 = vsel %vm547, %v569, 0.0
    %v607 = vsel %vm547, %v571, 0.0
    %v608 = vsel %vm547, %v573, 0.0
    %v609 = vsel %vm547, %v575, 0.0
    %v610 = vsel %vm547, %v577, 0.0
    %v611 = vsel %vm547, %v579, 0.0
    %v612 = vadd.f32 %v531, %v596
    %v613 = vadd.f32 %v532, %v597
    %v614 = vadd.f32 %v533, %v598
    %v615 = vadd.f32 %v534, %v599
    %v616 = vadd.f32 %v535, %v600
    %v617 = vadd.f32 %v536, %v601
    %v618 = vadd.f32 %v537, %v602
    %v619 = vadd.f32 %v538, %v603
    %v620 = vadd.f32 %v539, %v604
    %v621 = vadd.f32 %v540, %v605
    %v622 = vadd.f32 %v541, %v606
    %v623 = vadd.f32 %v542, %v607
    %v624 = vadd.f32 %v543, %v608
    %v625 = vadd.f32 %v544, %v609
    %v626 = vadd.f32 %v545, %v610
    %v627 = vadd.f32 %v546, %v611
    %vm628 = vcmp.le.s32.totalorder %v46, 126
    %629 = vrot.lane.b32.xlu0 %v12, 127
    %v630 = vpop.permute.xlu0 %629
    %631 = vrot.lane.b32.xlu0 %v13, 127
    %v632 = vpop.permute.xlu0 %631
    %633 = vrot.lane.b32.xlu0 %v14, 127
    %v634 = vpop.permute.xlu0 %633
    %635 = vrot.lane.b32.xlu0 %v15, 127
    %v636 = vpop.permute.xlu0 %635
    %637 = vrot.lane.b32.xlu0 %v16, 127
    %v638 = vpop.permute.xlu0 %637
    %639 = vrot.lane.b32.xlu0 %v17, 127
    %v640 = vpop.permute.xlu0 %639
    %641 = vrot.lane.b32.xlu0 %v18, 127
    %v642 = vpop.permute.xlu0 %641
    %643 = vrot.lane.b32.xlu0 %v19, 127
    %v644 = vpop.permute.xlu0 %643
    %645 = vrot.lane.b32.xlu0 %v20, 127
    %v646 = vpop.permute.xlu0 %645
    %647 = vrot.lane.b32.xlu0 %v21, 127
    %v648 = vpop.permute.xlu0 %647
    %649 = vrot.lane.b32.xlu0 %v22, 127
    %v650 = vpop.permute.xlu0 %649
    %651 = vrot.lane.b32.xlu0 %v23, 127
    %v652 = vpop.permute.xlu0 %651
    %653 = vrot.lane.b32.xlu0 %v24, 127
    %v654 = vpop.permute.xlu0 %653
    %655 = vrot.lane.b32.xlu0 %v25, 127
    %v656 = vpop.permute.xlu0 %655
    %657 = vrot.lane.b32.xlu0 %v26, 127
    %v658 = vpop.permute.xlu0 %657
    %659 = vrot.lane.b32.xlu0 %v27, 127
    %v660 = vpop.permute.xlu0 %659
    %v677 = vsel %vm628, %v630, 0.0
    %v678 = vsel %vm628, %v632, 0.0
    %v679 = vsel %vm628, %v634, 0.0
    %v680 = vsel %vm628, %v636, 0.0
    %v681 = vsel %vm628, %v638, 0.0
    %v682 = vsel %vm628, %v640, 0.0
    %v683 = vsel %vm628, %v642, 0.0
    %v684 = vsel %vm628, %v644, 0.0
    %v685 = vsel %vm628, %v646, 0.0
    %v686 = vsel %vm628, %v648, 0.0
    %v687 = vsel %vm628, %v650, 0.0
    %v688 = vsel %vm628, %v652, 0.0
    %v689 = vsel %vm628, %v654, 0.0
    %v690 = vsel %vm628, %v656, 0.0
    %v691 = vsel %vm628, %v658, 0.0
    %v692 = vsel %vm628, %v660, 0.0
    %v693 = vadd.f32 %v612, %v677
    %v694 = vadd.f32 %v613, %v678
    %v695 = vadd.f32 %v614, %v679
    %v696 = vadd.f32 %v615, %v680
    %v697 = vadd.f32 %v616, %v681
    %v698 = vadd.f32 %v617, %v682
    %v699 = vadd.f32 %v618, %v683
    %v700 = vadd.f32 %v619, %v684
    %v701 = vadd.f32 %v620, %v685
    %v702 = vadd.f32 %v621, %v686
    %v703 = vadd.f32 %v622, %v687
    %v704 = vadd.f32 %v623, %v688
    %v705 = vadd.f32 %v624, %v689
    %v706 = vadd.f32 %v625, %v690
    %v707 = vadd.f32 %v626, %v691
    %v708 = vadd.f32 %v627, %v692
    %vm709 = vcmp.gt.f32.partialorder %v693, 0.0
    %vm710 = vcmp.gt.f32.partialorder %v694, 0.0
    %vm711 = vcmp.gt.f32.partialorder %v695, 0.0
    %vm712 = vcmp.gt.f32.partialorder %v696, 0.0
    %vm713 = vcmp.gt.f32.partialorder %v697, 0.0
    %vm714 = vcmp.gt.f32.partialorder %v698, 0.0
    %vm715 = vcmp.gt.f32.partialorder %v699, 0.0
    %vm716 = vcmp.gt.f32.partialorder %v700, 0.0
    %vm717 = vcmp.gt.f32.partialorder %v701, 0.0
    %vm718 = vcmp.gt.f32.partialorder %v702, 0.0
    %vm719 = vcmp.gt.f32.partialorder %v703, 0.0
    %vm720 = vcmp.gt.f32.partialorder %v704, 0.0
    %vm721 = vcmp.gt.f32.partialorder %v705, 0.0
    %vm722 = vcmp.gt.f32.partialorder %v706, 0.0
    %vm723 = vcmp.gt.f32.partialorder %v707, 0.0
    %vm724 = vcmp.gt.f32.partialorder %v708, 0.0
    %v725 = vsel %vm709, 1.0, 0.0
    %v726 = vsel %vm710, 1.0, 0.0
    %v727 = vsel %vm711, 1.0, 0.0
    %v728 = vsel %vm712, 1.0, 0.0
    %v729 = vsel %vm713, 1.0, 0.0
    %v730 = vsel %vm714, 1.0, 0.0
    %v731 = vsel %vm715, 1.0, 0.0
    %v732 = vsel %vm716, 1.0, 0.0
    %v733 = vsel %vm717, 1.0, 0.0
    %v734 = vsel %vm718, 1.0, 0.0
    %v735 = vsel %vm719, 1.0, 0.0
    %v736 = vsel %vm720, 1.0, 0.0
    %v737 = vsel %vm721, 1.0, 0.0
    %v738 = vsel %vm722, 1.0, 0.0
    %v739 = vsel %vm723, 1.0, 0.0
    %v740 = vsel %vm724, 1.0, 0.0
    %v741 = vld [vmem:[%s1] sm:$0xff]
    %v742 = vld [vmem:[%s1 + $0x8] sm:$0xff]
    %v743 = vld [vmem:[%s1 + $0x10] sm:$0xff]
    %v744 = vld [vmem:[%s1 + $0x18] sm:$0xff]
    %v745 = vld [vmem:[%s1 + $0x20] sm:$0xff]
    %v746 = vld [vmem:[%s1 + $0x28] sm:$0xff]
    %v747 = vld [vmem:[%s1 + $0x30] sm:$0xff]
    %v748 = vld [vmem:[%s1 + $0x38] sm:$0xff]
    %v749 = vld [vmem:[%s1 + $0x40] sm:$0xff]
    %v750 = vld [vmem:[%s1 + $0x48] sm:$0xff]
    %v751 = vld [vmem:[%s1 + $0x50] sm:$0xff]
    %v752 = vld [vmem:[%s1 + $0x58] sm:$0xff]
    %v753 = vld [vmem:[%s1 + $0x60] sm:$0xff]
    %v754 = vld [vmem:[%s1 + $0x68] sm:$0xff]
    %v755 = vld [vmem:[%s1 + $0x70] sm:$0xff]
    %v756 = vld [vmem:[%s1 + $0x78] sm:$0xff]
    %v758 = vrot.slane %v756, 7
    %v775 = vrot.slane %v741, 7
    %v776 = vrot.slane %v742, 7
    %v777 = vsel %vm273, %v775, %v776
    %v778 = vrot.slane %v743, 7
    %v779 = vsel %vm273, %v776, %v778
    %v780 = vrot.slane %v744, 7
    %v781 = vsel %vm273, %v778, %v780
    %v782 = vrot.slane %v745, 7
    %v783 = vsel %vm273, %v780, %v782
    %v784 = vrot.slane %v746, 7
    %v785 = vsel %vm273, %v782, %v784
    %v786 = vrot.slane %v747, 7
    %v787 = vsel %vm273, %v784, %v786
    %v788 = vrot.slane %v748, 7
    %v789 = vsel %vm273, %v786, %v788
    %v790 = vrot.slane %v749, 7
    %v791 = vsel %vm273, %v788, %v790
    %v792 = vrot.slane %v750, 7
    %v793 = vsel %vm273, %v790, %v792
    %v794 = vrot.slane %v751, 7
    %v795 = vsel %vm273, %v792, %v794
    %v796 = vrot.slane %v752, 7
    %v797 = vsel %vm273, %v794, %v796
    %v798 = vrot.slane %v753, 7
    %v799 = vsel %vm273, %v796, %v798
    %v800 = vrot.slane %v754, 7
    %v801 = vsel %vm273, %v798, %v800
    %v802 = vrot.slane %v755, 7
    %v803 = vsel %vm273, %v800, %v802
    %v804 = vsel %vm273, %v802, %v758
    %v821 = vsel %vm273, %v758, %v775
    %v822 = vsel %vm239, %v821, 0.0
    %v823 = vsel %vm240, %v777, 0.0
    %v824 = vsel %vm241, %v779, 0.0
    %v825 = vsel %vm242, %v781, 0.0
    %v826 = vsel %vm243, %v783, 0.0
    %v827 = vsel %vm244, %v785, 0.0
    %v828 = vsel %vm245, %v787, 0.0
    %v829 = vsel %vm246, %v789, 0.0
    %v830 = vsel %vm247, %v791, 0.0
    %v831 = vsel %vm248, %v793, 0.0
    %v832 = vsel %vm249, %v795, 0.0
    %v833 = vsel %vm250, %v797, 0.0
    %v834 = vsel %vm251, %v799, 0.0
    %v835 = vsel %vm252, %v801, 0.0
    %v836 = vsel %vm253, %v803, 0.0
    %v837 = vsel %vm254, %v804, 0.0
    %v838 = vadd.f32 %v741, %v822
    %v839 = vadd.f32 %v742, %v823
    %v840 = vadd.f32 %v743, %v824
    %v841 = vadd.f32 %v744, %v825
    %v842 = vadd.f32 %v745, %v826
    %v843 = vadd.f32 %v746, %v827
    %v844 = vadd.f32 %v747, %v828
    %v845 = vadd.f32 %v748, %v829
    %v846 = vadd.f32 %v749, %v830
    %v847 = vadd.f32 %v750, %v831
    %v848 = vadd.f32 %v751, %v832
    %v849 = vadd.f32 %v752, %v833
    %v850 = vadd.f32 %v753, %v834
    %v851 = vadd.f32 %v754, %v835
    %v852 = vadd.f32 %v755, %v836
    %v853 = vadd.f32 %v756, %v837
    %v854 = vrot.slane %v741, 1
    %v855 = vrot.slane %v742, 1
    %v856 = vsel %vm369, %v854, %v855
    %v857 = vrot.slane %v743, 1
    %v858 = vsel %vm369, %v855, %v857
    %v859 = vrot.slane %v744, 1
    %v860 = vsel %vm369, %v857, %v859
    %v861 = vrot.slane %v745, 1
    %v862 = vsel %vm369, %v859, %v861
    %v863 = vrot.slane %v746, 1
    %v864 = vsel %vm369, %v861, %v863
    %v865 = vrot.slane %v747, 1
    %v866 = vsel %vm369, %v863, %v865
    %v867 = vrot.slane %v748, 1
    %v868 = vsel %vm369, %v865, %v867
    %v869 = vrot.slane %v749, 1
    %v870 = vsel %vm369, %v867, %v869
    %v871 = vrot.slane %v750, 1
    %v872 = vsel %vm369, %v869, %v871
    %v873 = vrot.slane %v751, 1
    %v874 = vsel %vm369, %v871, %v873
    %v875 = vrot.slane %v752, 1
    %v876 = vsel %vm369, %v873, %v875
    %v877 = vrot.slane %v753, 1
    %v878 = vsel %vm369, %v875, %v877
    %v879 = vrot.slane %v754, 1
    %v880 = vsel %vm369, %v877, %v879
    %v881 = vrot.slane %v755, 1
    %v882 = vsel %vm369, %v879, %v881
    %v883 = vrot.slane %v756, 1
    %v884 = vsel %vm369, %v881, %v883
    %v902 = vsel %vm369, %v883, %v854
    %v903 = vsel %vm353, %v856, 0.0
    %v904 = vsel %vm354, %v858, 0.0
    %v905 = vsel %vm355, %v860, 0.0
    %v906 = vsel %vm356, %v862, 0.0
    %v907 = vsel %vm357, %v864, 0.0
    %v908 = vsel %vm358, %v866, 0.0
    %v909 = vsel %vm359, %v868, 0.0
    %v910 = vsel %vm360, %v870, 0.0
    %v911 = vsel %vm361, %v872, 0.0
    %v912 = vsel %vm362, %v874, 0.0
    %v913 = vsel %vm363, %v876, 0.0
    %v914 = vsel %vm364, %v878, 0.0
    %v915 = vsel %vm365, %v880, 0.0
    %v916 = vsel %vm366, %v882, 0.0
    %v917 = vsel %vm367, %v884, 0.0
    %v918 = vsel %vm368, %v902, 0.0
    %v919 = vadd.f32 %v838, %v903
    %v920 = vadd.f32 %v839, %v904
    %v921 = vadd.f32 %v840, %v905
    %v922 = vadd.f32 %v841, %v906
    %v923 = vadd.f32 %v842, %v907
    %v924 = vadd.f32 %v843, %v908
    %v925 = vadd.f32 %v844, %v909
    %v926 = vadd.f32 %v845, %v910
    %v927 = vadd.f32 %v846, %v911
    %v928 = vadd.f32 %v847, %v912
    %v929 = vadd.f32 %v848, %v913
    %v930 = vadd.f32 %v849, %v914
    %v931 = vadd.f32 %v850, %v915
    %v932 = vadd.f32 %v851, %v916
    %v933 = vadd.f32 %v852, %v917
    %v934 = vadd.f32 %v853, %v918
    %v935 = vsel %vm451, %v755, 0.0
    %v936 = vsel %vm452, %v756, 0.0
    %v937 = vsel %vm453, %v741, 0.0
    %v938 = vsel %vm454, %v742, 0.0
    %v939 = vsel %vm455, %v743, 0.0
    %v940 = vsel %vm456, %v744, 0.0
    %v941 = vsel %vm457, %v745, 0.0
    %v942 = vsel %vm458, %v746, 0.0
    %v943 = vsel %vm459, %v747, 0.0
    %v944 = vsel %vm460, %v748, 0.0
    %v945 = vsel %vm461, %v749, 0.0
    %v946 = vsel %vm462, %v750, 0.0
    %v947 = vsel %vm463, %v751, 0.0
    %v948 = vsel %vm464, %v752, 0.0
    %v949 = vsel %vm465, %v753, 0.0
    %v950 = vsel %vm466, %v754, 0.0
    %v951 = vadd.f32 %v919, %v935
    %v952 = vadd.f32 %v920, %v936
    %v953 = vadd.f32 %v921, %v937
    %v954 = vadd.f32 %v922, %v938
    %v955 = vadd.f32 %v923, %v939
    %v956 = vadd.f32 %v924, %v940
    %v957 = vadd.f32 %v925, %v941
    %v958 = vadd.f32 %v926, %v942
    %v959 = vadd.f32 %v927, %v943
    %v960 = vadd.f32 %v928, %v944
    %v961 = vadd.f32 %v929, %v945
    %v962 = vadd.f32 %v930, %v946
    %v963 = vadd.f32 %v931, %v947
    %v964 = vadd.f32 %v932, %v948
    %v965 = vadd.f32 %v933, %v949
    %v966 = vadd.f32 %v934, %v950
    %v967 = vsel %vm499, %v743, 0.0
    %v968 = vsel %vm500, %v744, 0.0
    %v969 = vsel %vm501, %v745, 0.0
    %v970 = vsel %vm502, %v746, 0.0
    %v971 = vsel %vm503, %v747, 0.0
    %v972 = vsel %vm504, %v748, 0.0
    %v973 = vsel %vm505, %v749, 0.0
    %v974 = vsel %vm506, %v750, 0.0
    %v975 = vsel %vm507, %v751, 0.0
    %v976 = vsel %vm508, %v752, 0.0
    %v977 = vsel %vm509, %v753, 0.0
    %v978 = vsel %vm510, %v754, 0.0
    %v979 = vsel %vm511, %v755, 0.0
    %v980 = vsel %vm512, %v756, 0.0
    %v981 = vsel %vm513, %v741, 0.0
    %v982 = vsel %vm514, %v742, 0.0
    %v983 = vadd.f32 %v951, %v967
    %v984 = vadd.f32 %v952, %v968
    %v985 = vadd.f32 %v953, %v969
    %v986 = vadd.f32 %v954, %v970
    %v987 = vadd.f32 %v955, %v971
    %v988 = vadd.f32 %v956, %v972
    %v989 = vadd.f32 %v957, %v973
    %v990 = vadd.f32 %v958, %v974
    %v991 = vadd.f32 %v959, %v975
    %v992 = vadd.f32 %v960, %v976
    %v993 = vadd.f32 %v961, %v977
    %v994 = vadd.f32 %v962, %v978
    %v995 = vadd.f32 %v963, %v979
    %v996 = vadd.f32 %v964, %v980
    %v997 = vadd.f32 %v965, %v981
    %v998 = vadd.f32 %v966, %v982
    %999 = vrot.lane.b32.xlu0 %v741, 1
    %v1000 = vpop.permute.xlu0 %999
    %1001 = vrot.lane.b32.xlu0 %v742, 1
    %v1002 = vpop.permute.xlu0 %1001
    %1003 = vrot.lane.b32.xlu0 %v743, 1
    %v1004 = vpop.permute.xlu0 %1003
    %1005 = vrot.lane.b32.xlu0 %v744, 1
    %v1006 = vpop.permute.xlu0 %1005
    %1007 = vrot.lane.b32.xlu0 %v745, 1
    %v1008 = vpop.permute.xlu0 %1007
    %1009 = vrot.lane.b32.xlu0 %v746, 1
    %v1010 = vpop.permute.xlu0 %1009
    %1011 = vrot.lane.b32.xlu0 %v747, 1
    %v1012 = vpop.permute.xlu0 %1011
    %1013 = vrot.lane.b32.xlu0 %v748, 1
    %v1014 = vpop.permute.xlu0 %1013
    %1015 = vrot.lane.b32.xlu0 %v749, 1
    %v1016 = vpop.permute.xlu0 %1015
    %1017 = vrot.lane.b32.xlu0 %v750, 1
    %v1018 = vpop.permute.xlu0 %1017
    %1019 = vrot.lane.b32.xlu0 %v751, 1
    %v1020 = vpop.permute.xlu0 %1019
    %1021 = vrot.lane.b32.xlu0 %v752, 1
    %v1022 = vpop.permute.xlu0 %1021
    %1023 = vrot.lane.b32.xlu0 %v753, 1
    %v1024 = vpop.permute.xlu0 %1023
    %1025 = vrot.lane.b32.xlu0 %v754, 1
    %v1026 = vpop.permute.xlu0 %1025
    %1027 = vrot.lane.b32.xlu0 %v755, 1
    %v1028 = vpop.permute.xlu0 %1027
    %1029 = vrot.lane.b32.xlu0 %v756, 1
    %v1030 = vpop.permute.xlu0 %1029
    %v1047 = vsel %vm547, %v1000, 0.0
    %v1048 = vsel %vm547, %v1002, 0.0
    %v1049 = vsel %vm547, %v1004, 0.0
    %v1050 = vsel %vm547, %v1006, 0.0
    %v1051 = vsel %vm547, %v1008, 0.0
    %v1052 = vsel %vm547, %v1010, 0.0
    %v1053 = vsel %vm547, %v1012, 0.0
    %v1054 = vsel %vm547, %v1014, 0.0
    %v1055 = vsel %vm547, %v1016, 0.0
    %v1056 = vsel %vm547, %v1018, 0.0
    %v1057 = vsel %vm547, %v1020, 0.0
    %v1058 = vsel %vm547, %v1022, 0.0
    %v1059 = vsel %vm547, %v1024, 0.0
    %v1060 = vsel %vm547, %v1026, 0.0
    %v1061 = vsel %vm547, %v1028, 0.0
    %v1062 = vsel %vm547, %v1030, 0.0
    %v1063 = vadd.f32 %v983, %v1047
    %v1064 = vadd.f32 %v984, %v1048
    %v1065 = vadd.f32 %v985, %v1049
    %v1066 = vadd.f32 %v986, %v1050
    %v1067 = vadd.f32 %v987, %v1051
    %v1068 = vadd.f32 %v988, %v1052
    %v1069 = vadd.f32 %v989, %v1053
    %v1070 = vadd.f32 %v990, %v1054
    %v1071 = vadd.f32 %v991, %v1055
    %v1072 = vadd.f32 %v992, %v1056
    %v1073 = vadd.f32 %v993, %v1057
    %v1074 = vadd.f32 %v994, %v1058
    %v1075 = vadd.f32 %v995, %v1059
    %v1076 = vadd.f32 %v996, %v1060
    %v1077 = vadd.f32 %v997, %v1061
    %v1078 = vadd.f32 %v998, %v1062
    %1079 = vrot.lane.b32.xlu0 %v741, 127
    %v1080 = vpop.permute.xlu0 %1079
    %1081 = vrot.lane.b32.xlu0 %v742, 127
    %v1082 = vpop.permute.xlu0 %1081
    %1083 = vrot.lane.b32.xlu0 %v743, 127
    %v1084 = vpop.permute.xlu0 %1083
    %1085 = vrot.lane.b32.xlu0 %v744, 127
    %v1086 = vpop.permute.xlu0 %1085
    %1087 = vrot.lane.b32.xlu0 %v745, 127
    %v1088 = vpop.permute.xlu0 %1087
    %1089 = vrot.lane.b32.xlu0 %v746, 127
    %v1090 = vpop.permute.xlu0 %1089
    %1091 = vrot.lane.b32.xlu0 %v747, 127
    %v1092 = vpop.permute.xlu0 %1091
    %1093 = vrot.lane.b32.xlu0 %v748, 127
    %v1094 = vpop.permute.xlu0 %1093
    %1095 = vrot.lane.b32.xlu0 %v749, 127
    %v1096 = vpop.permute.xlu0 %1095
    %1097 = vrot.lane.b32.xlu0 %v750, 127
    %v1098 = vpop.permute.xlu0 %1097
    %1099 = vrot.lane.b32.xlu0 %v751, 127
    %v1100 = vpop.permute.xlu0 %1099
    %1101 = vrot.lane.b32.xlu0 %v752, 127
    %v1102 = vpop.permute.xlu0 %1101
    %1103 = vrot.lane.b32.xlu0 %v753, 127
    %v1104 = vpop.permute.xlu0 %1103
    %1105 = vrot.lane.b32.xlu0 %v754, 127
    %v1106 = vpop.permute.xlu0 %1105
    %1107 = vrot.lane.b32.xlu0 %v755, 127
    %v1108 = vpop.permute.xlu0 %1107
    %1109 = vrot.lane.b32.xlu0 %v756, 127
    %v1110 = vpop.permute.xlu0 %1109
    %v1127 = vsel %vm628, %v1080, 0.0
    %v1128 = vsel %vm628, %v1082, 0.0
    %v1129 = vsel %vm628, %v1084, 0.0
    %v1130 = vsel %vm628, %v1086, 0.0
    %v1131 = vsel %vm628, %v1088, 0.0
    %v1132 = vsel %vm628, %v1090, 0.0
    %v1133 = vsel %vm628, %v1092, 0.0
    %v1134 = vsel %vm628, %v1094, 0.0
    %v1135 = vsel %vm628, %v1096, 0.0
    %v1136 = vsel %vm628, %v1098, 0.0
    %v1137 = vsel %vm628, %v1100, 0.0
    %v1138 = vsel %vm628, %v1102, 0.0
    %v1139 = vsel %vm628, %v1104, 0.0
    %v1140 = vsel %vm628, %v1106, 0.0
    %v1141 = vsel %vm628, %v1108, 0.0
    %v1142 = vsel %vm628, %v1110, 0.0
    %v1143 = vadd.f32 %v1063, %v1127
    %v1144 = vadd.f32 %v1064, %v1128
    %v1145 = vadd.f32 %v1065, %v1129
    %v1146 = vadd.f32 %v1066, %v1130
    %v1147 = vadd.f32 %v1067, %v1131
    %v1148 = vadd.f32 %v1068, %v1132
    %v1149 = vadd.f32 %v1069, %v1133
    %v1150 = vadd.f32 %v1070, %v1134
    %v1151 = vadd.f32 %v1071, %v1135
    %v1152 = vadd.f32 %v1072, %v1136
    %v1153 = vadd.f32 %v1073, %v1137
    %v1154 = vadd.f32 %v1074, %v1138
    %v1155 = vadd.f32 %v1075, %v1139
    %v1156 = vadd.f32 %v1076, %v1140
    %v1157 = vadd.f32 %v1077, %v1141
    %v1158 = vadd.f32 %v1078, %v1142
    %vm1159 = vcmp.gt.f32.partialorder %v1143, 0.0
    %vm1160 = vcmp.gt.f32.partialorder %v1144, 0.0
    %vm1161 = vcmp.gt.f32.partialorder %v1145, 0.0
    %vm1162 = vcmp.gt.f32.partialorder %v1146, 0.0
    %vm1163 = vcmp.gt.f32.partialorder %v1147, 0.0
    %vm1164 = vcmp.gt.f32.partialorder %v1148, 0.0
    %vm1165 = vcmp.gt.f32.partialorder %v1149, 0.0
    %vm1166 = vcmp.gt.f32.partialorder %v1150, 0.0
    %vm1167 = vcmp.gt.f32.partialorder %v1151, 0.0
    %vm1168 = vcmp.gt.f32.partialorder %v1152, 0.0
    %vm1169 = vcmp.gt.f32.partialorder %v1153, 0.0
    %vm1170 = vcmp.gt.f32.partialorder %v1154, 0.0
    %vm1171 = vcmp.gt.f32.partialorder %v1155, 0.0
    %vm1172 = vcmp.gt.f32.partialorder %v1156, 0.0
    %vm1173 = vcmp.gt.f32.partialorder %v1157, 0.0
    %vm1174 = vcmp.gt.f32.partialorder %v1158, 0.0
    %v1175 = vsel %vm1159, 1.0, 0.0
    %v1176 = vsel %vm1160, 1.0, 0.0
    %v1177 = vsel %vm1161, 1.0, 0.0
    %v1178 = vsel %vm1162, 1.0, 0.0
    %v1179 = vsel %vm1163, 1.0, 0.0
    %v1180 = vsel %vm1164, 1.0, 0.0
    %v1181 = vsel %vm1165, 1.0, 0.0
    %v1182 = vsel %vm1166, 1.0, 0.0
    %v1183 = vsel %vm1167, 1.0, 0.0
    %v1184 = vsel %vm1168, 1.0, 0.0
    %v1185 = vsel %vm1169, 1.0, 0.0
    %v1186 = vsel %vm1170, 1.0, 0.0
    %v1187 = vsel %vm1171, 1.0, 0.0
    %v1188 = vsel %vm1172, 1.0, 0.0
    %v1189 = vsel %vm1173, 1.0, 0.0
    %v1190 = vsel %vm1174, 1.0, 0.0
    %v1191 = vmul.f32 %v725, %v1175
    %v1192 = vmul.f32 %v726, %v1176
    %v1193 = vmul.f32 %v727, %v1177
    %v1194 = vmul.f32 %v728, %v1178
    %v1195 = vmul.f32 %v729, %v1179
    %v1196 = vmul.f32 %v730, %v1180
    %v1197 = vmul.f32 %v731, %v1181
    %v1198 = vmul.f32 %v732, %v1182
    %v1199 = vmul.f32 %v733, %v1183
    %v1200 = vmul.f32 %v734, %v1184
    %v1201 = vmul.f32 %v735, %v1185
    %v1202 = vmul.f32 %v736, %v1186
    %v1203 = vmul.f32 %v737, %v1187
    %v1204 = vmul.f32 %v738, %v1188
    %v1205 = vmul.f32 %v739, %v1189
    %v1206 = vmul.f32 %v740, %v1190
    %v1207 = vadd.f32 %v1191, %v1192
    %v1208 = vadd.f32 %v1207, %v1193
    %v1209 = vadd.f32 %v1208, %v1194
    %v1210 = vadd.f32 %v1209, %v1195
    %v1211 = vadd.f32 %v1210, %v1196
    %v1212 = vadd.f32 %v1211, %v1197
    %v1213 = vadd.f32 %v1212, %v1198
    %v1214 = vadd.f32 %v1213, %v1199
    %v1215 = vadd.f32 %v1214, %v1200
    %v1216 = vadd.f32 %v1215, %v1201
    %v1217 = vadd.f32 %v1216, %v1202
    %v1218 = vadd.f32 %v1217, %v1203
    %v1219 = vadd.f32 %v1218, %v1204
    %v1220 = vadd.f32 %v1219, %v1205
    %v1221 = vadd.f32 %v1220, %v1206
    %1222 = vadd.xlane.f32.xlu0 %v1221
    %v1223 = vpop.xlane.xlu0 %1222
    %v1224 = vrot.slane %v1223, 4
    %v1225 = vadd.f32 %v1223, %v1224
    %v1226 = vrot.slane %v1225, 2
    %v1227 = vadd.f32 %v1225, %v1226
    %v1228 = vrot.slane %v1227, 1
    %v1229 = vadd.f32 %v1227, %v1228
    %s1230 = vtos %v1229
    %s1231 = scalar_lea.smem [#allocation2], 0
    %1232 = sst [smem:[%s1231]] %s1230
    // Predicated region
    $region10: #{_insert_lesions.12} parent=1 // pred_check
      _
    $region11: #{_insert_lesions.12} parent=1 // pred_check_branch
      %1234 = sbr.rel (0) target = $region13
    $region12: #{_insert_lesions.12} parent=1 // pred_region
      %1236 = vsyncadd [#allocation3], 0
      %s1238 = sshll.u32 %s2, 4
      %s1239 = int_to_ptr.hbm [resolvable:$true] %s1238
      %1241 = dma.smem_to_hbm [#allocation2], 16, %s1239, [#allocation3]
    $region13: #{_insert_lesions.12} parent=1 // pred_fallthru
      _
    // Predicated region
    $region14: #{_insert_lesions.12} parent=1 // pred_check
      _
    $region15: #{_insert_lesions.12} parent=1 // pred_check_branch
      %1243 = sbr.rel (0) target = $region17
    $region16: #{_insert_lesions.12} parent=1 // pred_region
      %1245 = dma.done [#allocation3], 16
    $region17: #{_insert_lesions.12} parent=1 // pred_fallthru
      _
    %1246 = sfence
    %1247 = vsyncpa [#allocation3], 1

// kernel: _insert_lesions.19
$region0: #{_insert_lesions.19}
  #allocation0 [shape = 'u32[]', space=smem, size = 0x4, offset = 0x4, fixed_abs, tag = 'smem constant byte address 0x4 - core index']
  #allocation1 [shape = 'u32[72,128]{1,0:T(1,128)}', space=vmem, size = 0x9000, scoped, tag = 'internal scratch']
  #allocation2 [shape = 'f32[1]{0:T(128)S(6)}', space=smem, size = 0x200, scoped, tag = 'scoped memory for _insert_lesions.19']
  %s0 = inlined_call_operand.<no memory space> [shape: f32[1], index: 0, kind: input, shape index: {}]
  %s1 = inlined_call_operand.vmem [shape: f32[128,128], index: 1, kind: input, shape index: {}]
  %s2 = inlined_call_operand.hbm [shape: f32[128,128], index: 2, kind: input, shape index: {}, may-alias: {2,3}]
  %s3 = inlined_call_operand.hbm [shape: f32[128,128], index: 3, kind: output, shape index: {}, may-alias: {2,3}]
  %s4 = sld [smem:[#allocation0]]
  $region26: #{_insert_lesions.19} parent=0
    _
  %s6 = ssub.s32 1, %s4
  %s7 = scalar_select 0, %s6, %s4
  %8 = sst [smem:[#allocation2]] %s0
  $region1: #{_insert_lesions.19} parent=0
    #allocation3 [shape = 'u8[65536]{0}', space=vmem, size = 0x10000, scoped, tag = 'input window, operand 2, single buffered']
    #allocation4 [shape = 's32[1]{0}', space=sflag, size = 0x4, scoped, tag = 'scoped memory for _insert_lesions.19']
    #allocation5 [shape = 's32[1]{0}', space=sflag, size = 0x4, scoped, tag = 'scoped memory for _insert_lesions.19']
    #allocation6 [shape = 'u8[65536]{0}', space=vmem, size = 0x10000, scoped, tag = 'output window, operand 0, single buffered']
    %9 = vsyncpa [#allocation4], 0
    %10 = vsyncpa [#allocation5], 0
    // Predicated region
    $region2: #{_insert_lesions.19} parent=1 // pred_check
      _
    $region3: #{_insert_lesions.19} parent=1 // pred_check_branch
      %12 = sbr.rel (0) target = $region5
    $region4: #{_insert_lesions.19} parent=1 // pred_region
      _
    $region5: #{_insert_lesions.19} parent=1 // pred_fallthru
      _
    // Predicated region
    $region6: #{_insert_lesions.19} parent=1 // pred_check
      _
    $region7: #{_insert_lesions.19} parent=1 // pred_check_branch
      %14 = sbr.rel (0) target = $region9
    $region8: #{_insert_lesions.19} parent=1 // pred_region
      _
    $region9: #{_insert_lesions.19} parent=1 // pred_fallthru
      _
    // Predicated region
    $region10: #{_insert_lesions.19} parent=1 // pred_check
      _
    $region11: #{_insert_lesions.19} parent=1 // pred_check_branch
      %16 = sbr.rel (0) target = $region13
    $region12: #{_insert_lesions.19} parent=1 // pred_region
      %18 = vsyncadd [#allocation4], 0
      %s19 = sshll.u32 %s2, 4
      %s20 = int_to_ptr.hbm [resolvable:$true] %s19
      %s21 = sshll.u32 [#allocation3], 4
      %s22 = int_to_ptr.vmem [resolvable:$true] %s21
      %27 = dma.hbm_to_vmem [thread:$0]  %s20, 2048, %s22, [#allocation4], 128, 128, 8
    $region13: #{_insert_lesions.19} parent=1 // pred_fallthru
      _
    // Predicated region
    $region14: #{_insert_lesions.19} parent=1 // pred_check
      _
    $region15: #{_insert_lesions.19} parent=1 // pred_check_branch
      %29 = sbr.rel (0) target = $region17
    $region16: #{_insert_lesions.19} parent=1 // pred_region
      %31 = dma.done [#allocation4], 2048
    $region17: #{_insert_lesions.19} parent=1 // pred_fallthru
      _
    %v32 = vld [vmem:[%s1] sm:$0xff]
    %v33 = vld [vmem:[%s1 + $0x8] sm:$0xff]
    %v34 = vld [vmem:[%s1 + $0x10] sm:$0xff]
    %v35 = vld [vmem:[%s1 + $0x18] sm:$0xff]
    %v36 = vld [vmem:[%s1 + $0x20] sm:$0xff]
    %v37 = vld [vmem:[%s1 + $0x28] sm:$0xff]
    %v38 = vld [vmem:[%s1 + $0x30] sm:$0xff]
    %v39 = vld [vmem:[%s1 + $0x38] sm:$0xff]
    %v40 = vld [vmem:[%s1 + $0x40] sm:$0xff]
    %v41 = vld [vmem:[%s1 + $0x48] sm:$0xff]
    %v42 = vld [vmem:[%s1 + $0x50] sm:$0xff]
    %v43 = vld [vmem:[%s1 + $0x58] sm:$0xff]
    %v44 = vld [vmem:[%s1 + $0x60] sm:$0xff]
    %v45 = vld [vmem:[%s1 + $0x68] sm:$0xff]
    %v46 = vld [vmem:[%s1 + $0x70] sm:$0xff]
    %v47 = vld [vmem:[%s1 + $0x78] sm:$0xff]
    %vm48 = vcmp.gt.f32.partialorder %v32, 0.0
    %vm49 = vcmp.gt.f32.partialorder %v33, 0.0
    %vm50 = vcmp.gt.f32.partialorder %v34, 0.0
    %vm51 = vcmp.gt.f32.partialorder %v35, 0.0
    %vm52 = vcmp.gt.f32.partialorder %v36, 0.0
    %vm53 = vcmp.gt.f32.partialorder %v37, 0.0
    %vm54 = vcmp.gt.f32.partialorder %v38, 0.0
    %vm55 = vcmp.gt.f32.partialorder %v39, 0.0
    %vm56 = vcmp.gt.f32.partialorder %v40, 0.0
    %vm57 = vcmp.gt.f32.partialorder %v41, 0.0
    %vm58 = vcmp.gt.f32.partialorder %v42, 0.0
    %vm59 = vcmp.gt.f32.partialorder %v43, 0.0
    %vm60 = vcmp.gt.f32.partialorder %v44, 0.0
    %vm61 = vcmp.gt.f32.partialorder %v45, 0.0
    %vm62 = vcmp.gt.f32.partialorder %v46, 0.0
    %vm63 = vcmp.gt.f32.partialorder %v47, 0.0
    %s64 = sld [smem:[#allocation2]]
    %v65 = vld [vmem:[#allocation3] sm:$0xff]
    %v66 = vld [vmem:[#allocation3 + $0x8] sm:$0xff]
    %v67 = vld [vmem:[#allocation3 + $0x10] sm:$0xff]
    %v68 = vld [vmem:[#allocation3 + $0x18] sm:$0xff]
    %v69 = vld [vmem:[#allocation3 + $0x20] sm:$0xff]
    %v70 = vld [vmem:[#allocation3 + $0x28] sm:$0xff]
    %v71 = vld [vmem:[#allocation3 + $0x30] sm:$0xff]
    %v72 = vld [vmem:[#allocation3 + $0x38] sm:$0xff]
    %v73 = vld [vmem:[#allocation3 + $0x40] sm:$0xff]
    %v74 = vld [vmem:[#allocation3 + $0x48] sm:$0xff]
    %v75 = vld [vmem:[#allocation3 + $0x50] sm:$0xff]
    %v76 = vld [vmem:[#allocation3 + $0x58] sm:$0xff]
    %v77 = vld [vmem:[#allocation3 + $0x60] sm:$0xff]
    %v78 = vld [vmem:[#allocation3 + $0x68] sm:$0xff]
    %v79 = vld [vmem:[#allocation3 + $0x70] sm:$0xff]
    %v80 = vld [vmem:[#allocation3 + $0x78] sm:$0xff]
    %v81 = vstv %s64
    %v82 = vsel %vm48, %v81, %v65
    %v83 = vsel %vm49, %v81, %v66
    %v84 = vsel %vm50, %v81, %v67
    %v85 = vsel %vm51, %v81, %v68
    %v86 = vsel %vm52, %v81, %v69
    %v87 = vsel %vm53, %v81, %v70
    %v88 = vsel %vm54, %v81, %v71
    %v89 = vsel %vm55, %v81, %v72
    %v90 = vsel %vm56, %v81, %v73
    %v91 = vsel %vm57, %v81, %v74
    %v92 = vsel %vm58, %v81, %v75
    %v93 = vsel %vm59, %v81, %v76
    %v94 = vsel %vm60, %v81, %v77
    %v95 = vsel %vm61, %v81, %v78
    %v96 = vsel %vm62, %v81, %v79
    %v97 = vsel %vm63, %v81, %v80
    %98 = vst [vmem:[#allocation6] sm:$0xff] %v82
    %99 = vst [vmem:[#allocation6 + $0x8] sm:$0xff] %v83
    %100 = vst [vmem:[#allocation6 + $0x10] sm:$0xff] %v84
    %101 = vst [vmem:[#allocation6 + $0x18] sm:$0xff] %v85
    %102 = vst [vmem:[#allocation6 + $0x20] sm:$0xff] %v86
    %103 = vst [vmem:[#allocation6 + $0x28] sm:$0xff] %v87
    %104 = vst [vmem:[#allocation6 + $0x30] sm:$0xff] %v88
    %105 = vst [vmem:[#allocation6 + $0x38] sm:$0xff] %v89
    %106 = vst [vmem:[#allocation6 + $0x40] sm:$0xff] %v90
    %107 = vst [vmem:[#allocation6 + $0x48] sm:$0xff] %v91
    %108 = vst [vmem:[#allocation6 + $0x50] sm:$0xff] %v92
    %109 = vst [vmem:[#allocation6 + $0x58] sm:$0xff] %v93
    %110 = vst [vmem:[#allocation6 + $0x60] sm:$0xff] %v94
    %111 = vst [vmem:[#allocation6 + $0x68] sm:$0xff] %v95
    %112 = vst [vmem:[#allocation6 + $0x70] sm:$0xff] %v96
    %113 = vst [vmem:[#allocation6 + $0x78] sm:$0xff] %v97
    // Predicated region
    $region18: #{_insert_lesions.19} parent=1 // pred_check
      _
    $region19: #{_insert_lesions.19} parent=1 // pred_check_branch
      %115 = sbr.rel (0) target = $region21
    $region20: #{_insert_lesions.19} parent=1 // pred_region
      %117 = vsyncadd [#allocation5], 0
      %s118 = sshll.u32 [#allocation6], 4
      %s119 = int_to_ptr.vmem [resolvable:$true] %s118
      %s120 = sshll.u32 %s3, 4
      %s121 = int_to_ptr.hbm [resolvable:$true] %s120
      %126 = dma.vmem_to_hbm [thread:$0]  %s119, 2048, %s121, [#allocation5], 128, 128, 8
    $region21: #{_insert_lesions.19} parent=1 // pred_fallthru
      _
    // Predicated region
    $region22: #{_insert_lesions.19} parent=1 // pred_check
      _
    $region23: #{_insert_lesions.19} parent=1 // pred_check_branch
      %128 = sbr.rel (0) target = $region25
    $region24: #{_insert_lesions.19} parent=1 // pred_region
      %130 = dma.done [#allocation5], 2048
    $region25: #{_insert_lesions.19} parent=1 // pred_fallthru
      _
    %131 = vsyncpa [#allocation4], 1
    %132 = vsyncpa [#allocation5], 1

// kernel: body.33
$region0: #{body.33}
  #allocation0 [shape = 'u32[]', space=smem, size = 0x4, offset = 0x4, fixed_abs, tag = 'smem constant byte address 0x4 - core index']
  #allocation1 [shape = 'u32[72,128]{1,0:T(1,128)}', space=vmem, size = 0x9000, scoped, tag = 'internal scratch']
  %s0 = inlined_call_operand.vmem [shape: f32[2], index: 0, kind: input, shape index: {}]
  %s1 = inlined_call_operand.vmem [shape: f32[128,128], index: 1, kind: input, shape index: {}]
  %s2 = inlined_call_operand.vmem [shape: f32[128,128], index: 2, kind: input, shape index: {}, may-alias: {2,5}]
  %s3 = inlined_call_operand.vmem [shape: f32[128,128], index: 3, kind: input, shape index: {}]
  %s4 = inlined_call_operand.vmem [shape: f32[128,128], index: 4, kind: input, shape index: {}]
  %s5 = inlined_call_operand.vmem [shape: f32[128,128], index: 5, kind: output, shape index: {0}, may-alias: {2,5}]
  %s6 = inlined_call_operand.hbm [shape: f32[1], index: 6, kind: output, shape index: {1}]
  %7 = xla_tuple %s5, %s6
  %s8 = sld [smem:[#allocation0]]
  $region42: #{body.33} parent=0
    _
  %s10 = ssub.s32 1, %s8
  %s11 = scalar_select 0, %s10, %s8
  $region1: #{body.33} parent=0
    #allocation2 [shape = 'u8[512]{0}', space=smem, size = 0x200, scoped, tag = 'input window, operand 0, single buffered']
    #allocation3 [shape = 's32[1]{0}', space=sflag, size = 0x4, scoped, tag = 'scoped memory for body.33']
    #allocation4 [shape = 's32[1]{0}', space=sflag, size = 0x4, scoped, tag = 'scoped memory for body.33']
    #allocation5 [shape = 'u8[512]{0}', space=smem, size = 0x200, scoped, tag = 'output window, operand 1, single buffered']
    %12 = vsyncpa [#allocation4], 0
    %13 = vsyncpa [#allocation3], 0
    // Predicated region
    $region2: #{body.33} parent=1 // pred_check
      _
    $region3: #{body.33} parent=1 // pred_check_branch
      %15 = sbr.rel (0) target = $region5
    $region4: #{body.33} parent=1 // pred_region
      %17 = vsyncadd [#allocation4], 0
      %s19 = sshll.u32 %s0, 4
      %s20 = int_to_ptr.vmem [resolvable:$true] %s19
      %22 = dma.vmem_to_smem %s20, 16, [#allocation2], [#allocation4]
    $region5: #{body.33} parent=1 // pred_fallthru
      _
    // Predicated region
    $region6: #{body.33} parent=1 // pred_check
      _
    $region7: #{body.33} parent=1 // pred_check_branch
      %24 = sbr.rel (0) target = $region9
    $region8: #{body.33} parent=1 // pred_region
      _
    $region9: #{body.33} parent=1 // pred_fallthru
      _
    // Predicated region
    $region10: #{body.33} parent=1 // pred_check
      _
    $region11: #{body.33} parent=1 // pred_check_branch
      %26 = sbr.rel (0) target = $region13
    $region12: #{body.33} parent=1 // pred_region
      _
    $region13: #{body.33} parent=1 // pred_fallthru
      _
    // Predicated region
    $region14: #{body.33} parent=1 // pred_check
      _
    $region15: #{body.33} parent=1 // pred_check_branch
      %28 = sbr.rel (0) target = $region17
    $region16: #{body.33} parent=1 // pred_region
      _
    $region17: #{body.33} parent=1 // pred_fallthru
      _
    // Predicated region
    $region18: #{body.33} parent=1 // pred_check
      _
    $region19: #{body.33} parent=1 // pred_check_branch
      %30 = sbr.rel (0) target = $region21
    $region20: #{body.33} parent=1 // pred_region
      _
    $region21: #{body.33} parent=1 // pred_fallthru
      _
    // Predicated region
    $region22: #{body.33} parent=1 // pred_check
      _
    $region23: #{body.33} parent=1 // pred_check_branch
      %32 = sbr.rel (0) target = $region25
    $region24: #{body.33} parent=1 // pred_region
      %34 = dma.done [#allocation4], 16
    $region25: #{body.33} parent=1 // pred_fallthru
      _
    %35 = sfence
    %v36 = vld [vmem:[%s2] sm:$0xff]
    %v37 = vld [vmem:[%s2 + $0x8] sm:$0xff]
    %v38 = vld [vmem:[%s2 + $0x10] sm:$0xff]
    %v39 = vld [vmem:[%s2 + $0x18] sm:$0xff]
    %v40 = vld [vmem:[%s2 + $0x20] sm:$0xff]
    %v41 = vld [vmem:[%s2 + $0x28] sm:$0xff]
    %v42 = vld [vmem:[%s2 + $0x30] sm:$0xff]
    %v43 = vld [vmem:[%s2 + $0x38] sm:$0xff]
    %v44 = vld [vmem:[%s2 + $0x40] sm:$0xff]
    %v45 = vld [vmem:[%s2 + $0x48] sm:$0xff]
    %v46 = vld [vmem:[%s2 + $0x50] sm:$0xff]
    %v47 = vld [vmem:[%s2 + $0x58] sm:$0xff]
    %v48 = vld [vmem:[%s2 + $0x60] sm:$0xff]
    %v49 = vld [vmem:[%s2 + $0x68] sm:$0xff]
    %v50 = vld [vmem:[%s2 + $0x70] sm:$0xff]
    %v51 = vld [vmem:[%s2 + $0x78] sm:$0xff]
    %v52 = vld [vmem:[%s1] sm:$0xff]
    %v53 = vld [vmem:[%s1 + $0x8] sm:$0xff]
    %v54 = vld [vmem:[%s1 + $0x10] sm:$0xff]
    %v55 = vld [vmem:[%s1 + $0x18] sm:$0xff]
    %v56 = vld [vmem:[%s1 + $0x20] sm:$0xff]
    %v57 = vld [vmem:[%s1 + $0x28] sm:$0xff]
    %v58 = vld [vmem:[%s1 + $0x30] sm:$0xff]
    %v59 = vld [vmem:[%s1 + $0x38] sm:$0xff]
    %v60 = vld [vmem:[%s1 + $0x40] sm:$0xff]
    %v61 = vld [vmem:[%s1 + $0x48] sm:$0xff]
    %v62 = vld [vmem:[%s1 + $0x50] sm:$0xff]
    %v63 = vld [vmem:[%s1 + $0x58] sm:$0xff]
    %v64 = vld [vmem:[%s1 + $0x60] sm:$0xff]
    %v65 = vld [vmem:[%s1 + $0x68] sm:$0xff]
    %v66 = vld [vmem:[%s1 + $0x70] sm:$0xff]
    %v67 = vld [vmem:[%s1 + $0x78] sm:$0xff]
    %v68 = vsub.f32 1.0, %v36
    %v69 = vsub.f32 1.0, %v37
    %v70 = vsub.f32 1.0, %v38
    %v71 = vsub.f32 1.0, %v39
    %v72 = vsub.f32 1.0, %v40
    %v73 = vsub.f32 1.0, %v41
    %v74 = vsub.f32 1.0, %v42
    %v75 = vsub.f32 1.0, %v43
    %v76 = vsub.f32 1.0, %v44
    %v77 = vsub.f32 1.0, %v45
    %v78 = vsub.f32 1.0, %v46
    %v79 = vsub.f32 1.0, %v47
    %v80 = vsub.f32 1.0, %v48
    %v81 = vsub.f32 1.0, %v49
    %v82 = vsub.f32 1.0, %v50
    %v83 = vsub.f32 1.0, %v51
    %v84 = vmul.f32 %v52, %v68
    %v85 = vmul.f32 %v53, %v69
    %v86 = vmul.f32 %v54, %v70
    %v87 = vmul.f32 %v55, %v71
    %v88 = vmul.f32 %v56, %v72
    %v89 = vmul.f32 %v57, %v73
    %v90 = vmul.f32 %v58, %v74
    %v91 = vmul.f32 %v59, %v75
    %v92 = vmul.f32 %v60, %v76
    %v93 = vmul.f32 %v61, %v77
    %v94 = vmul.f32 %v62, %v78
    %v95 = vmul.f32 %v63, %v79
    %v96 = vmul.f32 %v64, %v80
    %v97 = vmul.f32 %v65, %v81
    %v98 = vmul.f32 %v66, %v82
    %v99 = vmul.f32 %v67, %v83
    %v100 = vlaneseq
    %v101 = vshrl.u32 %v100, 7
    %v102 = vadd.s32 %v101, 8
    %v103 = vadd.s32 %v101, 16
    %v104 = vadd.s32 %v101, 24
    %v105 = vadd.s32 %v101, 32
    %v106 = vadd.s32 %v101, 40
    %v107 = vadd.s32 %v101, 48
    %v108 = vadd.s32 %v101, 56
    %v109 = vadd.s32 %v101, 64
    %v110 = vadd.s32 %v101, 72
    %v111 = vadd.s32 %v101, 80
    %v112 = vadd.s32 %v101, 88
    %v113 = vadd.s32 %v101, 96
    %v114 = vadd.s32 %v101, 104
    %v115 = vadd.s32 %v101, 112
    %v116 = vadd.s32 %v101, 120
    %v117 = vlaneseq
    %v118 = vand.u32 %v117, 127
    %vm119 = vcmp.lt.s32.totalorder %v101, 0
    %v120 = vsub.s32 0, %v101
    %v121 = vsel %vm119, %v120, %v101
    %v122 = vshrl.u32 %v121, 4
    %v123 = vand.u32 %v121, 15
    %v124 = vsub.s32 0, %v123
    %v125 = vsel %vm119, %v124, %v123
    %vm126 = vcmp.lt.s32.totalorder %v102, 0
    %v127 = vsub.s32 0, %v102
    %v128 = vsel %vm126, %v127, %v102
    %v129 = vshrl.u32 %v128, 4
    %v130 = vand.u32 %v128, 15
    %v131 = vsub.s32 0, %v130
    %v132 = vsel %vm126, %v131, %v130
    %vm133 = vcmp.lt.s32.totalorder %v103, 0
    %v134 = vsub.s32 0, %v103
    %v135 = vsel %vm133, %v134, %v103
    %v136 = vshrl.u32 %v135, 4
    %v137 = vand.u32 %v135, 15
    %v138 = vsub.s32 0, %v137
    %v139 = vsel %vm133, %v138, %v137
    %vm140 = vcmp.lt.s32.totalorder %v104, 0
    %v141 = vsub.s32 0, %v104
    %v142 = vsel %vm140, %v141, %v104
    %v143 = vshrl.u32 %v142, 4
    %v144 = vand.u32 %v142, 15
    %v145 = vsub.s32 0, %v144
    %v146 = vsel %vm140, %v145, %v144
    %vm147 = vcmp.lt.s32.totalorder %v105, 0
    %v148 = vsub.s32 0, %v105
    %v149 = vsel %vm147, %v148, %v105
    %v150 = vshrl.u32 %v149, 4
    %v151 = vand.u32 %v149, 15
    %v152 = vsub.s32 0, %v151
    %v153 = vsel %vm147, %v152, %v151
    %vm154 = vcmp.lt.s32.totalorder %v106, 0
    %v155 = vsub.s32 0, %v106
    %v156 = vsel %vm154, %v155, %v106
    %v157 = vshrl.u32 %v156, 4
    %v158 = vand.u32 %v156, 15
    %v159 = vsub.s32 0, %v158
    %v160 = vsel %vm154, %v159, %v158
    %vm161 = vcmp.lt.s32.totalorder %v107, 0
    %v162 = vsub.s32 0, %v107
    %v163 = vsel %vm161, %v162, %v107
    %v164 = vshrl.u32 %v163, 4
    %v165 = vand.u32 %v163, 15
    %v166 = vsub.s32 0, %v165
    %v167 = vsel %vm161, %v166, %v165
    %vm168 = vcmp.lt.s32.totalorder %v108, 0
    %v169 = vsub.s32 0, %v108
    %v170 = vsel %vm168, %v169, %v108
    %v171 = vshrl.u32 %v170, 4
    %v172 = vand.u32 %v170, 15
    %v173 = vsub.s32 0, %v172
    %v174 = vsel %vm168, %v173, %v172
    %vm175 = vcmp.lt.s32.totalorder %v109, 0
    %v176 = vsub.s32 0, %v109
    %v177 = vsel %vm175, %v176, %v109
    %v178 = vshrl.u32 %v177, 4
    %v179 = vand.u32 %v177, 15
    %v180 = vsub.s32 0, %v179
    %v181 = vsel %vm175, %v180, %v179
    %vm182 = vcmp.lt.s32.totalorder %v110, 0
    %v183 = vsub.s32 0, %v110
    %v184 = vsel %vm182, %v183, %v110
    %v185 = vshrl.u32 %v184, 4
    %v186 = vand.u32 %v184, 15
    %v187 = vsub.s32 0, %v186
    %v188 = vsel %vm182, %v187, %v186
    %vm189 = vcmp.lt.s32.totalorder %v111, 0
    %v190 = vsub.s32 0, %v111
    %v191 = vsel %vm189, %v190, %v111
    %v192 = vshrl.u32 %v191, 4
    %v193 = vand.u32 %v191, 15
    %v194 = vsub.s32 0, %v193
    %v195 = vsel %vm189, %v194, %v193
    %vm196 = vcmp.lt.s32.totalorder %v112, 0
    %v197 = vsub.s32 0, %v112
    %v198 = vsel %vm196, %v197, %v112
    %v199 = vshrl.u32 %v198, 4
    %v200 = vand.u32 %v198, 15
    %v201 = vsub.s32 0, %v200
    %v202 = vsel %vm196, %v201, %v200
    %vm203 = vcmp.lt.s32.totalorder %v113, 0
    %v204 = vsub.s32 0, %v113
    %v205 = vsel %vm203, %v204, %v113
    %v206 = vshrl.u32 %v205, 4
    %v207 = vand.u32 %v205, 15
    %v208 = vsub.s32 0, %v207
    %v209 = vsel %vm203, %v208, %v207
    %vm210 = vcmp.lt.s32.totalorder %v114, 0
    %v211 = vsub.s32 0, %v114
    %v212 = vsel %vm210, %v211, %v114
    %v213 = vshrl.u32 %v212, 4
    %v214 = vand.u32 %v212, 15
    %v215 = vsub.s32 0, %v214
    %v216 = vsel %vm210, %v215, %v214
    %vm217 = vcmp.lt.s32.totalorder %v115, 0
    %v218 = vsub.s32 0, %v115
    %v219 = vsel %vm217, %v218, %v115
    %v220 = vshrl.u32 %v219, 4
    %v221 = vand.u32 %v219, 15
    %v222 = vsub.s32 0, %v221
    %v223 = vsel %vm217, %v222, %v221
    %vm224 = vcmp.lt.s32.totalorder %v116, 0
    %v225 = vsub.s32 0, %v116
    %v226 = vsel %vm224, %v225, %v116
    %v227 = vshrl.u32 %v226, 4
    %v228 = vand.u32 %v226, 15
    %v229 = vsub.s32 0, %v228
    %v230 = vsel %vm224, %v229, %v228
    %vm231 = vcmp.ne.s32.totalorder %v125, 0
    %vm232 = vcmp.ne.s32.totalorder %v132, 0
    %vm233 = vcmp.ne.s32.totalorder %v139, 0
    %vm234 = vcmp.ne.s32.totalorder %v146, 0
    %vm235 = vcmp.ne.s32.totalorder %v153, 0
    %vm236 = vcmp.ne.s32.totalorder %v160, 0
    %vm237 = vcmp.ne.s32.totalorder %v167, 0
    %vm238 = vcmp.ne.s32.totalorder %v174, 0
    %vm239 = vcmp.ne.s32.totalorder %v181, 0
    %vm240 = vcmp.ne.s32.totalorder %v188, 0
    %vm241 = vcmp.ne.s32.totalorder %v195, 0
    %vm242 = vcmp.ne.s32.totalorder %v202, 0
    %vm243 = vcmp.ne.s32.totalorder %v209, 0
    %vm244 = vcmp.ne.s32.totalorder %v216, 0
    %vm245 = vcmp.ne.s32.totalorder %v223, 0
    %vm246 = vcmp.ne.s32.totalorder %v230, 0
    %vm247 = vcmp.lt.s32.totalorder %v125, 0
    %vm248 = vcmp.lt.s32.totalorder %v132, 0
    %vm249 = vcmp.lt.s32.totalorder %v139, 0
    %vm250 = vcmp.lt.s32.totalorder %v146, 0
    %vm251 = vcmp.lt.s32.totalorder %v153, 0
    %vm252 = vcmp.lt.s32.totalorder %v160, 0
    %vm253 = vcmp.lt.s32.totalorder %v167, 0
    %vm254 = vcmp.lt.s32.totalorder %v174, 0
    %vm255 = vcmp.lt.s32.totalorder %v181, 0
    %vm256 = vcmp.lt.s32.totalorder %v188, 0
    %vm257 = vcmp.lt.s32.totalorder %v195, 0
    %vm258 = vcmp.lt.s32.totalorder %v202, 0
    %vm259 = vcmp.lt.s32.totalorder %v209, 0
    %vm260 = vcmp.lt.s32.totalorder %v216, 0
    %vm261 = vcmp.lt.s32.totalorder %v223, 0
    %vm262 = vcmp.lt.s32.totalorder %v230, 0
    %vm263 = vmand %vm247, %vm231
    %vm264 = vmand %vm248, %vm232
    %vm265 = vmand %vm249, %vm233
    %vm266 = vmand %vm250, %vm234
    %vm267 = vmand %vm251, %vm235
    %vm268 = vmand %vm252, %vm236
    %vm269 = vmand %vm253, %vm237
    %vm270 = vmand %vm254, %vm238
    %vm271 = vmand %vm255, %vm239
    %vm272 = vmand %vm256, %vm240
    %vm273 = vmand %vm257, %vm241
    %vm274 = vmand %vm258, %vm242
    %vm275 = vmand %vm259, %vm243
    %vm276 = vmand %vm260, %vm244
    %vm277 = vmand %vm261, %vm245
    %vm278 = vmand %vm262, %vm246
    %v279 = vadd.s32 %v125, 16
    %v280 = vadd.s32 %v132, 16
    %v281 = vadd.s32 %v139, 16
    %v282 = vadd.s32 %v146, 16
    %v283 = vadd.s32 %v153, 16
    %v284 = vadd.s32 %v160, 16
    %v285 = vadd.s32 %v167, 16
    %v286 = vadd.s32 %v174, 16
    %v287 = vadd.s32 %v181, 16
    %v288 = vadd.s32 %v188, 16
    %v289 = vadd.s32 %v195, 16
    %v290 = vadd.s32 %v202, 16
    %v291 = vadd.s32 %v209, 16
    %v292 = vadd.s32 %v216, 16
    %v293 = vadd.s32 %v223, 16
    %v294 = vadd.s32 %v230, 16
    %v295 = vsel %vm263, %v279, %v125
    %v296 = vsel %vm264, %v280, %v132
    %v297 = vsel %vm265, %v281, %v139
    %v298 = vsel %vm266, %v282, %v146
    %v299 = vsel %vm267, %v283, %v153
    %v300 = vsel %vm268, %v284, %v160
    %v301 = vsel %vm269, %v285, %v167
    %v302 = vsel %vm270, %v286, %v174
    %v303 = vsel %vm271, %v287, %v181
    %v304 = vsel %vm272, %v288, %v188
    %v305 = vsel %vm273, %v289, %v195
    %v306 = vsel %vm274, %v290, %v202
    %v307 = vsel %vm275, %v291, %v209
    %v308 = vsel %vm276, %v292, %v216
    %v309 = vsel %vm277, %v293, %v223
    %v310 = vsel %vm278, %v294, %v230
    %vm311 = vcmp.ne.s32.totalorder %v295, 0
    %vm312 = vcmp.ne.s32.totalorder %v296, 0
    %vm313 = vcmp.ne.s32.totalorder %v297, 0
    %vm314 = vcmp.ne.s32.totalorder %v298, 0
    %vm315 = vcmp.ne.s32.totalorder %v299, 0
    %vm316 = vcmp.ne.s32.totalorder %v300, 0
    %vm317 = vcmp.ne.s32.totalorder %v301, 0
    %vm318 = vcmp.ne.s32.totalorder %v302, 0
    %vm319 = vcmp.ne.s32.totalorder %v303, 0
    %vm320 = vcmp.ne.s32.totalorder %v304, 0
    %vm321 = vcmp.ne.s32.totalorder %v305, 0
    %vm322 = vcmp.ne.s32.totalorder %v306, 0
    %vm323 = vcmp.ne.s32.totalorder %v307, 0
    %vm324 = vcmp.ne.s32.totalorder %v308, 0
    %vm325 = vcmp.ne.s32.totalorder %v309, 0
    %vm326 = vcmp.ne.s32.totalorder %v310, 0
    %v328 = vrot.slane %v51, 7
    %vm345 = vcmask 1040384
    %v346 = vrot.slane %v36, 7
    %v347 = vrot.slane %v37, 7
    %v348 = vsel %vm345, %v346, %v347
    %v349 = vrot.slane %v38, 7
    %v350 = vsel %vm345, %v347, %v349
    %v351 = vrot.slane %v39, 7
    %v352 = vsel %vm345, %v349, %v351
    %v353 = vrot.slane %v40, 7
    %v354 = vsel %vm345, %v351, %v353
    %v355 = vrot.slane %v41, 7
    %v356 = vsel %vm345, %v353, %v355
    %v357 = vrot.slane %v42, 7
    %v358 = vsel %vm345, %v355, %v357
    %v359 = vrot.slane %v43, 7
    %v360 = vsel %vm345, %v357, %v359
    %v361 = vrot.slane %v44, 7
    %v362 = vsel %vm345, %v359, %v361
    %v363 = vrot.slane %v45, 7
    %v364 = vsel %vm345, %v361, %v363
    %v365 = vrot.slane %v46, 7
    %v366 = vsel %vm345, %v363, %v365
    %v367 = vrot.slane %v47, 7
    %v368 = vsel %vm345, %v365, %v367
    %v369 = vrot.slane %v48, 7
    %v370 = vsel %vm345, %v367, %v369
    %v371 = vrot.slane %v49, 7
    %v372 = vsel %vm345, %v369, %v371
    %v373 = vrot.slane %v50, 7
    %v374 = vsel %vm345, %v371, %v373
    %v375 = vsel %vm345, %v373, %v328
    %v392 = vsel %vm345, %v328, %v346
    %v393 = vsel %vm311, %v392, 0.0
    %v394 = vsel %vm312, %v348, 0.0
    %v395 = vsel %vm313, %v350, 0.0
    %v396 = vsel %vm314, %v352, 0.0
    %v397 = vsel %vm315, %v354, 0.0
    %v398 = vsel %vm316, %v356, 0.0
    %v399 = vsel %vm317, %v358, 0.0
    %v400 = vsel %vm318, %v360, 0.0
    %v401 = vsel %vm319, %v362, 0.0
    %v402 = vsel %vm320, %v364, 0.0
    %v403 = vsel %vm321, %v366, 0.0
    %v404 = vsel %vm322, %v368, 0.0
    %v405 = vsel %vm323, %v370, 0.0
    %v406 = vsel %vm324, %v372, 0.0
    %v407 = vsel %vm325, %v374, 0.0
    %v408 = vsel %vm326, %v375, 0.0
    %v409 = vadd.f32 %v36, %v393
    %v410 = vadd.f32 %v37, %v394
    %v411 = vadd.f32 %v38, %v395
    %v412 = vadd.f32 %v39, %v396
    %v413 = vadd.f32 %v40, %v397
    %v414 = vadd.f32 %v41, %v398
    %v415 = vadd.f32 %v42, %v399
    %v416 = vadd.f32 %v43, %v400
    %v417 = vadd.f32 %v44, %v401
    %v418 = vadd.f32 %v45, %v402
    %v419 = vadd.f32 %v46, %v403
    %v420 = vadd.f32 %v47, %v404
    %v421 = vadd.f32 %v48, %v405
    %v422 = vadd.f32 %v49, %v406
    %v423 = vadd.f32 %v50, %v407
    %v424 = vadd.f32 %v51, %v408
    %vm425 = vcmp.ne.s32.totalorder %v295, 15
    %vm426 = vcmp.ne.s32.totalorder %v296, 15
    %vm427 = vcmp.ne.s32.totalorder %v297, 15
    %vm428 = vcmp.ne.s32.totalorder %v298, 15
    %vm429 = vcmp.ne.s32.totalorder %v299, 15
    %vm430 = vcmp.ne.s32.totalorder %v300, 15
    %vm431 = vcmp.ne.s32.totalorder %v301, 15
    %vm432 = vcmp.ne.s32.totalorder %v302, 15
    %vm433 = vcmp.ne.s32.totalorder %v303, 15
    %vm434 = vcmp.ne.s32.totalorder %v304, 15
    %vm435 = vcmp.ne.s32.totalorder %v305, 15
    %vm436 = vcmp.ne.s32.totalorder %v306, 15
    %vm437 = vcmp.ne.s32.totalorder %v307, 15
    %vm438 = vcmp.ne.s32.totalorder %v308, 15
    %vm439 = vcmp.ne.s32.totalorder %v309, 15
    %vm440 = vcmp.ne.s32.totalorder %v310, 15
    %vm441 = vcmask 1046528
    %v442 = vrot.slane %v36, 1
    %v443 = vrot.slane %v37, 1
    %v444 = vsel %vm441, %v442, %v443
    %v445 = vrot.slane %v38, 1
    %v446 = vsel %vm441, %v443, %v445
    %v447 = vrot.slane %v39, 1
    %v448 = vsel %vm441, %v445, %v447
    %v449 = vrot.slane %v40, 1
    %v450 = vsel %vm441, %v447, %v449
    %v451 = vrot.slane %v41, 1
    %v452 = vsel %vm441, %v449, %v451
    %v453 = vrot.slane %v42, 1
    %v454 = vsel %vm441, %v451, %v453
    %v455 = vrot.slane %v43, 1
    %v456 = vsel %vm441, %v453, %v455
    %v457 = vrot.slane %v44, 1
    %v458 = vsel %vm441, %v455, %v457
    %v459 = vrot.slane %v45, 1
    %v460 = vsel %vm441, %v457, %v459
    %v461 = vrot.slane %v46, 1
    %v462 = vsel %vm441, %v459, %v461
    %v463 = vrot.slane %v47, 1
    %v464 = vsel %vm441, %v461, %v463
    %v465 = vrot.slane %v48, 1
    %v466 = vsel %vm441, %v463, %v465
    %v467 = vrot.slane %v49, 1
    %v468 = vsel %vm441, %v465, %v467
    %v469 = vrot.slane %v50, 1
    %v470 = vsel %vm441, %v467, %v469
    %v471 = vrot.slane %v51, 1
    %v472 = vsel %vm441, %v469, %v471
    %v490 = vsel %vm441, %v471, %v442
    %v491 = vsel %vm425, %v444, 0.0
    %v492 = vsel %vm426, %v446, 0.0
    %v493 = vsel %vm427, %v448, 0.0
    %v494 = vsel %vm428, %v450, 0.0
    %v495 = vsel %vm429, %v452, 0.0
    %v496 = vsel %vm430, %v454, 0.0
    %v497 = vsel %vm431, %v456, 0.0
    %v498 = vsel %vm432, %v458, 0.0
    %v499 = vsel %vm433, %v460, 0.0
    %v500 = vsel %vm434, %v462, 0.0
    %v501 = vsel %vm435, %v464, 0.0
    %v502 = vsel %vm436, %v466, 0.0
    %v503 = vsel %vm437, %v468, 0.0
    %v504 = vsel %vm438, %v470, 0.0
    %v505 = vsel %vm439, %v472, 0.0
    %v506 = vsel %vm440, %v490, 0.0
    %v507 = vadd.f32 %v409, %v491
    %v508 = vadd.f32 %v410, %v492
    %v509 = vadd.f32 %v411, %v493
    %v510 = vadd.f32 %v412, %v494
    %v511 = vadd.f32 %v413, %v495
    %v512 = vadd.f32 %v414, %v496
    %v513 = vadd.f32 %v415, %v497
    %v514 = vadd.f32 %v416, %v498
    %v515 = vadd.f32 %v417, %v499
    %v516 = vadd.f32 %v418, %v500
    %v517 = vadd.f32 %v419, %v501
    %v518 = vadd.f32 %v420, %v502
    %v519 = vadd.f32 %v421, %v503
    %v520 = vadd.f32 %v422, %v504
    %v521 = vadd.f32 %v423, %v505
    %v522 = vadd.f32 %v424, %v506
    %vm523 = vcmp.ge.s32.totalorder %v101, 16
    %vm524 = vcmp.ge.s32.totalorder %v102, 16
    %vm525 = vcmp.ge.s32.totalorder %v103, 16
    %vm526 = vcmp.ge.s32.totalorder %v104, 16
    %vm527 = vcmp.ge.s32.totalorder %v105, 16
    %vm528 = vcmp.ge.s32.totalorder %v106, 16
    %vm529 = vcmp.ge.s32.totalorder %v107, 16
    %vm530 = vcmp.ge.s32.totalorder %v108, 16
    %vm531 = vcmp.ge.s32.totalorder %v109, 16
    %vm532 = vcmp.ge.s32.totalorder %v110, 16
    %vm533 = vcmp.ge.s32.totalorder %v111, 16
    %vm534 = vcmp.ge.s32.totalorder %v112, 16
    %vm535 = vcmp.ge.s32.totalorder %v113, 16
    %vm536 = vcmp.ge.s32.totalorder %v114, 16
    %vm537 = vcmp.ge.s32.totalorder %v115, 16
    %vm538 = vcmp.ge.s32.totalorder %v116, 16
    %v539 = vsel %vm523, %v50, 0.0
    %v540 = vsel %vm524, %v51, 0.0
    %v541 = vsel %vm525, %v36, 0.0
    %v542 = vsel %vm526, %v37, 0.0
    %v543 = vsel %vm527, %v38, 0.0
    %v544 = vsel %vm528, %v39, 0.0
    %v545 = vsel %vm529, %v40, 0.0
    %v546 = vsel %vm530, %v41, 0.0
    %v547 = vsel %vm531, %v42, 0.0
    %v548 = vsel %vm532, %v43, 0.0
    %v549 = vsel %vm533, %v44, 0.0
    %v550 = vsel %vm534, %v45, 0.0
    %v551 = vsel %vm535, %v46, 0.0
    %v552 = vsel %vm536, %v47, 0.0
    %v553 = vsel %vm537, %v48, 0.0
    %v554 = vsel %vm538, %v49, 0.0
    %v555 = vadd.f32 %v507, %v539
    %v556 = vadd.f32 %v508, %v540
    %v557 = vadd.f32 %v509, %v541
    %v558 = vadd.f32 %v510, %v542
    %v559 = vadd.f32 %v511, %v543
    %v560 = vadd.f32 %v512, %v544
    %v561 = vadd.f32 %v513, %v545
    %v562 = vadd.f32 %v514, %v546
    %v563 = vadd.f32 %v515, %v547
    %v564 = vadd.f32 %v516, %v548
    %v565 = vadd.f32 %v517, %v549
    %v566 = vadd.f32 %v518, %v550
    %v567 = vadd.f32 %v519, %v551
    %v568 = vadd.f32 %v520, %v552
    %v569 = vadd.f32 %v521, %v553
    %v570 = vadd.f32 %v522, %v554
    %vm571 = vcmp.lt.s32.totalorder %v101, 112
    %vm572 = vcmp.lt.s32.totalorder %v102, 112
    %vm573 = vcmp.lt.s32.totalorder %v103, 112
    %vm574 = vcmp.lt.s32.totalorder %v104, 112
    %vm575 = vcmp.lt.s32.totalorder %v105, 112
    %vm576 = vcmp.lt.s32.totalorder %v106, 112
    %vm577 = vcmp.lt.s32.totalorder %v107, 112
    %vm578 = vcmp.lt.s32.totalorder %v108, 112
    %vm579 = vcmp.lt.s32.totalorder %v109, 112
    %vm580 = vcmp.lt.s32.totalorder %v110, 112
    %vm581 = vcmp.lt.s32.totalorder %v111, 112
    %vm582 = vcmp.lt.s32.totalorder %v112, 112
    %vm583 = vcmp.lt.s32.totalorder %v113, 112
    %vm584 = vcmp.lt.s32.totalorder %v114, 112
    %vm585 = vcmp.lt.s32.totalorder %v115, 112
    %vm586 = vcmp.lt.s32.totalorder %v116, 112
    %v587 = vsel %vm571, %v38, 0.0
    %v588 = vsel %vm572, %v39, 0.0
    %v589 = vsel %vm573, %v40, 0.0
    %v590 = vsel %vm574, %v41, 0.0
    %v591 = vsel %vm575, %v42, 0.0
    %v592 = vsel %vm576, %v43, 0.0
    %v593 = vsel %vm577, %v44, 0.0
    %v594 = vsel %vm578, %v45, 0.0
    %v595 = vsel %vm579, %v46, 0.0
    %v596 = vsel %vm580, %v47, 0.0
    %v597 = vsel %vm581, %v48, 0.0
    %v598 = vsel %vm582, %v49, 0.0
    %v599 = vsel %vm583, %v50, 0.0
    %v600 = vsel %vm584, %v51, 0.0
    %v601 = vsel %vm585, %v36, 0.0
    %v602 = vsel %vm586, %v37, 0.0
    %v603 = vadd.f32 %v555, %v587
    %v604 = vadd.f32 %v556, %v588
    %v605 = vadd.f32 %v557, %v589
    %v606 = vadd.f32 %v558, %v590
    %v607 = vadd.f32 %v559, %v591
    %v608 = vadd.f32 %v560, %v592
    %v609 = vadd.f32 %v561, %v593
    %v610 = vadd.f32 %v562, %v594
    %v611 = vadd.f32 %v563, %v595
    %v612 = vadd.f32 %v564, %v596
    %v613 = vadd.f32 %v565, %v597
    %v614 = vadd.f32 %v566, %v598
    %v615 = vadd.f32 %v567, %v599
    %v616 = vadd.f32 %v568, %v600
    %v617 = vadd.f32 %v569, %v601
    %v618 = vadd.f32 %v570, %v602
    %vm619 = vcmp.ge.s32.totalorder %v118, 1
    %620 = vrot.lane.b32.xlu0 %v36, 1
    %v621 = vpop.permute.xlu0 %620
    %622 = vrot.lane.b32.xlu0 %v37, 1
    %v623 = vpop.permute.xlu0 %622
    %624 = vrot.lane.b32.xlu0 %v38, 1
    %v625 = vpop.permute.xlu0 %624
    %626 = vrot.lane.b32.xlu0 %v39, 1
    %v627 = vpop.permute.xlu0 %626
    %628 = vrot.lane.b32.xlu0 %v40, 1
    %v629 = vpop.permute.xlu0 %628
    %630 = vrot.lane.b32.xlu0 %v41, 1
    %v631 = vpop.permute.xlu0 %630
    %632 = vrot.lane.b32.xlu0 %v42, 1
    %v633 = vpop.permute.xlu0 %632
    %634 = vrot.lane.b32.xlu0 %v43, 1
    %v635 = vpop.permute.xlu0 %634
    %636 = vrot.lane.b32.xlu0 %v44, 1
    %v637 = vpop.permute.xlu0 %636
    %638 = vrot.lane.b32.xlu0 %v45, 1
    %v639 = vpop.permute.xlu0 %638
    %640 = vrot.lane.b32.xlu0 %v46, 1
    %v641 = vpop.permute.xlu0 %640
    %642 = vrot.lane.b32.xlu0 %v47, 1
    %v643 = vpop.permute.xlu0 %642
    %644 = vrot.lane.b32.xlu0 %v48, 1
    %v645 = vpop.permute.xlu0 %644
    %646 = vrot.lane.b32.xlu0 %v49, 1
    %v647 = vpop.permute.xlu0 %646
    %648 = vrot.lane.b32.xlu0 %v50, 1
    %v649 = vpop.permute.xlu0 %648
    %650 = vrot.lane.b32.xlu0 %v51, 1
    %v651 = vpop.permute.xlu0 %650
    %v668 = vsel %vm619, %v621, 0.0
    %v669 = vsel %vm619, %v623, 0.0
    %v670 = vsel %vm619, %v625, 0.0
    %v671 = vsel %vm619, %v627, 0.0
    %v672 = vsel %vm619, %v629, 0.0
    %v673 = vsel %vm619, %v631, 0.0
    %v674 = vsel %vm619, %v633, 0.0
    %v675 = vsel %vm619, %v635, 0.0
    %v676 = vsel %vm619, %v637, 0.0
    %v677 = vsel %vm619, %v639, 0.0
    %v678 = vsel %vm619, %v641, 0.0
    %v679 = vsel %vm619, %v643, 0.0
    %v680 = vsel %vm619, %v645, 0.0
    %v681 = vsel %vm619, %v647, 0.0
    %v682 = vsel %vm619, %v649, 0.0
    %v683 = vsel %vm619, %v651, 0.0
    %v684 = vadd.f32 %v603, %v668
    %v685 = vadd.f32 %v604, %v669
    %v686 = vadd.f32 %v605, %v670
    %v687 = vadd.f32 %v606, %v671
    %v688 = vadd.f32 %v607, %v672
    %v689 = vadd.f32 %v608, %v673
    %v690 = vadd.f32 %v609, %v674
    %v691 = vadd.f32 %v610, %v675
    %v692 = vadd.f32 %v611, %v676
    %v693 = vadd.f32 %v612, %v677
    %v694 = vadd.f32 %v613, %v678
    %v695 = vadd.f32 %v614, %v679
    %v696 = vadd.f32 %v615, %v680
    %v697 = vadd.f32 %v616, %v681
    %v698 = vadd.f32 %v617, %v682
    %v699 = vadd.f32 %v618, %v683
    %vm700 = vcmp.le.s32.totalorder %v118, 126
    %701 = vrot.lane.b32.xlu0 %v36, 127
    %v702 = vpop.permute.xlu0 %701
    %703 = vrot.lane.b32.xlu0 %v37, 127
    %v704 = vpop.permute.xlu0 %703
    %705 = vrot.lane.b32.xlu0 %v38, 127
    %v706 = vpop.permute.xlu0 %705
    %707 = vrot.lane.b32.xlu0 %v39, 127
    %v708 = vpop.permute.xlu0 %707
    %709 = vrot.lane.b32.xlu0 %v40, 127
    %v710 = vpop.permute.xlu0 %709
    %711 = vrot.lane.b32.xlu0 %v41, 127
    %v712 = vpop.permute.xlu0 %711
    %713 = vrot.lane.b32.xlu0 %v42, 127
    %v714 = vpop.permute.xlu0 %713
    %715 = vrot.lane.b32.xlu0 %v43, 127
    %v716 = vpop.permute.xlu0 %715
    %717 = vrot.lane.b32.xlu0 %v44, 127
    %v718 = vpop.permute.xlu0 %717
    %719 = vrot.lane.b32.xlu0 %v45, 127
    %v720 = vpop.permute.xlu0 %719
    %721 = vrot.lane.b32.xlu0 %v46, 127
    %v722 = vpop.permute.xlu0 %721
    %723 = vrot.lane.b32.xlu0 %v47, 127
    %v724 = vpop.permute.xlu0 %723
    %725 = vrot.lane.b32.xlu0 %v48, 127
    %v726 = vpop.permute.xlu0 %725
    %727 = vrot.lane.b32.xlu0 %v49, 127
    %v728 = vpop.permute.xlu0 %727
    %729 = vrot.lane.b32.xlu0 %v50, 127
    %v730 = vpop.permute.xlu0 %729
    %731 = vrot.lane.b32.xlu0 %v51, 127
    %v732 = vpop.permute.xlu0 %731
    %v749 = vsel %vm700, %v702, 0.0
    %v750 = vsel %vm700, %v704, 0.0
    %v751 = vsel %vm700, %v706, 0.0
    %v752 = vsel %vm700, %v708, 0.0
    %v753 = vsel %vm700, %v710, 0.0
    %v754 = vsel %vm700, %v712, 0.0
    %v755 = vsel %vm700, %v714, 0.0
    %v756 = vsel %vm700, %v716, 0.0
    %v757 = vsel %vm700, %v718, 0.0
    %v758 = vsel %vm700, %v720, 0.0
    %v759 = vsel %vm700, %v722, 0.0
    %v760 = vsel %vm700, %v724, 0.0
    %v761 = vsel %vm700, %v726, 0.0
    %v762 = vsel %vm700, %v728, 0.0
    %v763 = vsel %vm700, %v730, 0.0
    %v764 = vsel %vm700, %v732, 0.0
    %v765 = vadd.f32 %v684, %v749
    %v766 = vadd.f32 %v685, %v750
    %v767 = vadd.f32 %v686, %v751
    %v768 = vadd.f32 %v687, %v752
    %v769 = vadd.f32 %v688, %v753
    %v770 = vadd.f32 %v689, %v754
    %v771 = vadd.f32 %v690, %v755
    %v772 = vadd.f32 %v691, %v756
    %v773 = vadd.f32 %v692, %v757
    %v774 = vadd.f32 %v693, %v758
    %v775 = vadd.f32 %v694, %v759
    %v776 = vadd.f32 %v695, %v760
    %v777 = vadd.f32 %v696, %v761
    %v778 = vadd.f32 %v697, %v762
    %v779 = vadd.f32 %v698, %v763
    %v780 = vadd.f32 %v699, %v764
    %vm781 = vcmp.gt.f32.partialorder %v765, 0.0
    %vm782 = vcmp.gt.f32.partialorder %v766, 0.0
    %vm783 = vcmp.gt.f32.partialorder %v767, 0.0
    %vm784 = vcmp.gt.f32.partialorder %v768, 0.0
    %vm785 = vcmp.gt.f32.partialorder %v769, 0.0
    %vm786 = vcmp.gt.f32.partialorder %v770, 0.0
    %vm787 = vcmp.gt.f32.partialorder %v771, 0.0
    %vm788 = vcmp.gt.f32.partialorder %v772, 0.0
    %vm789 = vcmp.gt.f32.partialorder %v773, 0.0
    %vm790 = vcmp.gt.f32.partialorder %v774, 0.0
    %vm791 = vcmp.gt.f32.partialorder %v775, 0.0
    %vm792 = vcmp.gt.f32.partialorder %v776, 0.0
    %vm793 = vcmp.gt.f32.partialorder %v777, 0.0
    %vm794 = vcmp.gt.f32.partialorder %v778, 0.0
    %vm795 = vcmp.gt.f32.partialorder %v779, 0.0
    %vm796 = vcmp.gt.f32.partialorder %v780, 0.0
    %v797 = vsel %vm781, 1.0, 0.0
    %v798 = vsel %vm782, 1.0, 0.0
    %v799 = vsel %vm783, 1.0, 0.0
    %v800 = vsel %vm784, 1.0, 0.0
    %v801 = vsel %vm785, 1.0, 0.0
    %v802 = vsel %vm786, 1.0, 0.0
    %v803 = vsel %vm787, 1.0, 0.0
    %v804 = vsel %vm788, 1.0, 0.0
    %v805 = vsel %vm789, 1.0, 0.0
    %v806 = vsel %vm790, 1.0, 0.0
    %v807 = vsel %vm791, 1.0, 0.0
    %v808 = vsel %vm792, 1.0, 0.0
    %v809 = vsel %vm793, 1.0, 0.0
    %v810 = vsel %vm794, 1.0, 0.0
    %v811 = vsel %vm795, 1.0, 0.0
    %v812 = vsel %vm796, 1.0, 0.0
    %v813 = vmul.f32 %v797, %v84
    %v814 = vmul.f32 %v798, %v85
    %v815 = vmul.f32 %v799, %v86
    %v816 = vmul.f32 %v800, %v87
    %v817 = vmul.f32 %v801, %v88
    %v818 = vmul.f32 %v802, %v89
    %v819 = vmul.f32 %v803, %v90
    %v820 = vmul.f32 %v804, %v91
    %v821 = vmul.f32 %v805, %v92
    %v822 = vmul.f32 %v806, %v93
    %v823 = vmul.f32 %v807, %v94
    %v824 = vmul.f32 %v808, %v95
    %v825 = vmul.f32 %v809, %v96
    %v826 = vmul.f32 %v810, %v97
    %v827 = vmul.f32 %v811, %v98
    %v828 = vmul.f32 %v812, %v99
    %s829 = sld [smem:[#allocation2]]
    %v830 = vld [vmem:[%s3] sm:$0xff]
    %v831 = vld [vmem:[%s3 + $0x8] sm:$0xff]
    %v832 = vld [vmem:[%s3 + $0x10] sm:$0xff]
    %v833 = vld [vmem:[%s3 + $0x18] sm:$0xff]
    %v834 = vld [vmem:[%s3 + $0x20] sm:$0xff]
    %v835 = vld [vmem:[%s3 + $0x28] sm:$0xff]
    %v836 = vld [vmem:[%s3 + $0x30] sm:$0xff]
    %v837 = vld [vmem:[%s3 + $0x38] sm:$0xff]
    %v838 = vld [vmem:[%s3 + $0x40] sm:$0xff]
    %v839 = vld [vmem:[%s3 + $0x48] sm:$0xff]
    %v840 = vld [vmem:[%s3 + $0x50] sm:$0xff]
    %v841 = vld [vmem:[%s3 + $0x58] sm:$0xff]
    %v842 = vld [vmem:[%s3 + $0x60] sm:$0xff]
    %v843 = vld [vmem:[%s3 + $0x68] sm:$0xff]
    %v844 = vld [vmem:[%s3 + $0x70] sm:$0xff]
    %v845 = vld [vmem:[%s3 + $0x78] sm:$0xff]
    %v846 = vstv %s829
    %vm847 = vcmp.ge.f32.partialorder %v830, %v846
    %vm848 = vcmp.ge.f32.partialorder %v831, %v846
    %vm849 = vcmp.ge.f32.partialorder %v832, %v846
    %vm850 = vcmp.ge.f32.partialorder %v833, %v846
    %vm851 = vcmp.ge.f32.partialorder %v834, %v846
    %vm852 = vcmp.ge.f32.partialorder %v835, %v846
    %vm853 = vcmp.ge.f32.partialorder %v836, %v846
    %vm854 = vcmp.ge.f32.partialorder %v837, %v846
    %vm855 = vcmp.ge.f32.partialorder %v838, %v846
    %vm856 = vcmp.ge.f32.partialorder %v839, %v846
    %vm857 = vcmp.ge.f32.partialorder %v840, %v846
    %vm858 = vcmp.ge.f32.partialorder %v841, %v846
    %vm859 = vcmp.ge.f32.partialorder %v842, %v846
    %vm860 = vcmp.ge.f32.partialorder %v843, %v846
    %vm861 = vcmp.ge.f32.partialorder %v844, %v846
    %vm862 = vcmp.ge.f32.partialorder %v845, %v846
    %v863 = vsel %vm847, %v813, 0.0
    %v864 = vsel %vm848, %v814, 0.0
    %v865 = vsel %vm849, %v815, 0.0
    %v866 = vsel %vm850, %v816, 0.0
    %v867 = vsel %vm851, %v817, 0.0
    %v868 = vsel %vm852, %v818, 0.0
    %v869 = vsel %vm853, %v819, 0.0
    %v870 = vsel %vm854, %v820, 0.0
    %v871 = vsel %vm855, %v821, 0.0
    %v872 = vsel %vm856, %v822, 0.0
    %v873 = vsel %vm857, %v823, 0.0
    %v874 = vsel %vm858, %v824, 0.0
    %v875 = vsel %vm859, %v825, 0.0
    %v876 = vsel %vm860, %v826, 0.0
    %v877 = vsel %vm861, %v827, 0.0
    %v878 = vsel %vm862, %v828, 0.0
    %s879 = sld [smem:[#allocation2 + $0x1]]
    %v880 = vadd.f32 %v863, %v864
    %v881 = vadd.f32 %v880, %v865
    %v882 = vadd.f32 %v881, %v866
    %v883 = vadd.f32 %v882, %v867
    %v884 = vadd.f32 %v883, %v868
    %v885 = vadd.f32 %v884, %v869
    %v886 = vadd.f32 %v885, %v870
    %v887 = vadd.f32 %v886, %v871
    %v888 = vadd.f32 %v887, %v872
    %v889 = vadd.f32 %v888, %v873
    %v890 = vadd.f32 %v889, %v874
    %v891 = vadd.f32 %v890, %v875
    %v892 = vadd.f32 %v891, %v876
    %v893 = vadd.f32 %v892, %v877
    %v894 = vadd.f32 %v893, %v878
    %895 = vadd.xlane.f32.xlu0 %v894
    %v896 = vpop.xlane.xlu0 %895
    %v897 = vrot.slane %v896, 4
    %v898 = vadd.f32 %v896, %v897
    %v899 = vrot.slane %v898, 2
    %v900 = vadd.f32 %v898, %v899
    %v901 = vrot.slane %v900, 1
    %v902 = vadd.f32 %v900, %v901
    %s903 = vtos %v902
    %v904 = vadd.f32 %v84, %v85
    %v905 = vadd.f32 %v904, %v86
    %v906 = vadd.f32 %v905, %v87
    %v907 = vadd.f32 %v906, %v88
    %v908 = vadd.f32 %v907, %v89
    %v909 = vadd.f32 %v908, %v90
    %v910 = vadd.f32 %v909, %v91
    %v911 = vadd.f32 %v910, %v92
    %v912 = vadd.f32 %v911, %v93
    %v913 = vadd.f32 %v912, %v94
    %v914 = vadd.f32 %v913, %v95
    %v915 = vadd.f32 %v914, %v96
    %v916 = vadd.f32 %v915, %v97
    %v917 = vadd.f32 %v916, %v98
    %v918 = vadd.f32 %v917, %v99
    %919 = vadd.xlane.f32.xlu0 %v918
    %v920 = vpop.xlane.xlu0 %919
    %v921 = vrot.slane %v920, 4
    %v922 = vadd.f32 %v920, %v921
    %v923 = vrot.slane %v922, 2
    %v924 = vadd.f32 %v922, %v923
    %v925 = vrot.slane %v924, 1
    %v926 = vadd.f32 %v924, %v925
    %s927 = vtos %v926
    %s928 = smax.f32 %s927, 1e-12
    %v929 = vstv %s928
    %v930 = vrcp.pop %v929
    %v931 = vmul.f32 %v929, %v930
    %v932 = vsub.f32 1.0, %v931
    %v933 = vmul.f32 %v930, %v932
    %v934 = vadd.f32 %v930, %v933
    %vm935 = vweird.f32 %v929
    %vm936 = vweird.f32 %v930
    %vm937 = vmor %vm935, %vm936
    %v938 = vsel %vm937, %v930, %v934
    %v939 = vand.u32 2147483647, %v929
    %vm940 = vcmp.eq.f32.partialorder %v939, 8.507059e+37
    %v941 = vand.u32 %v929, 2147483648
    %v942 = vor.u32 1.1754944e-38, %v941
    %v943 = vsel %vm940, %v942, %v938
    %s944 = vtos %v943
    %s945 = smul.f32 %s903, %s944
    %p946 = scmp.gt.f32.partialorder %s945, %s879
    %s947 = ssub.f32 %s945, %s879
    %s948 = smax.f32 %s945, 1e-12
    %v949 = vstv %s948
    %v950 = vrcp.pop %v949
    %v951 = vmul.f32 %v949, %v950
    %v952 = vsub.f32 1.0, %v951
    %v953 = vmul.f32 %v950, %v952
    %v954 = vadd.f32 %v950, %v953
    %vm955 = vweird.f32 %v949
    %vm956 = vweird.f32 %v950
    %vm957 = vmor %vm955, %vm956
    %v958 = vsel %vm957, %v950, %v954
    %v959 = vand.u32 2147483647, %v949
    %vm960 = vcmp.eq.f32.partialorder %v959, 8.507059e+37
    %v961 = vand.u32 %v949, 2147483648
    %v962 = vor.u32 1.1754944e-38, %v961
    %v963 = vsel %vm960, %v962, %v958
    %s964 = vtos %v963
    %s965 = smul.f32 %s947, %s964
    %s966 = scalar_select %p946, %s965, 0.0
    %v967 = vld [vmem:[%s4] sm:$0xff]
    %v968 = vld [vmem:[%s4 + $0x8] sm:$0xff]
    %v969 = vld [vmem:[%s4 + $0x10] sm:$0xff]
    %v970 = vld [vmem:[%s4 + $0x18] sm:$0xff]
    %v971 = vld [vmem:[%s4 + $0x20] sm:$0xff]
    %v972 = vld [vmem:[%s4 + $0x28] sm:$0xff]
    %v973 = vld [vmem:[%s4 + $0x30] sm:$0xff]
    %v974 = vld [vmem:[%s4 + $0x38] sm:$0xff]
    %v975 = vld [vmem:[%s4 + $0x40] sm:$0xff]
    %v976 = vld [vmem:[%s4 + $0x48] sm:$0xff]
    %v977 = vld [vmem:[%s4 + $0x50] sm:$0xff]
    %v978 = vld [vmem:[%s4 + $0x58] sm:$0xff]
    %v979 = vld [vmem:[%s4 + $0x60] sm:$0xff]
    %v980 = vld [vmem:[%s4 + $0x68] sm:$0xff]
    %v981 = vld [vmem:[%s4 + $0x70] sm:$0xff]
    %v982 = vld [vmem:[%s4 + $0x78] sm:$0xff]
    %v983 = vstv %s966
    %vm984 = vcmp.ge.f32.partialorder %v967, %v983
    %vm985 = vcmp.ge.f32.partialorder %v968, %v983
    %vm986 = vcmp.ge.f32.partialorder %v969, %v983
    %vm987 = vcmp.ge.f32.partialorder %v970, %v983
    %vm988 = vcmp.ge.f32.partialorder %v971, %v983
    %vm989 = vcmp.ge.f32.partialorder %v972, %v983
    %vm990 = vcmp.ge.f32.partialorder %v973, %v983
    %vm991 = vcmp.ge.f32.partialorder %v974, %v983
    %vm992 = vcmp.ge.f32.partialorder %v975, %v983
    %vm993 = vcmp.ge.f32.partialorder %v976, %v983
    %vm994 = vcmp.ge.f32.partialorder %v977, %v983
    %vm995 = vcmp.ge.f32.partialorder %v978, %v983
    %vm996 = vcmp.ge.f32.partialorder %v979, %v983
    %vm997 = vcmp.ge.f32.partialorder %v980, %v983
    %vm998 = vcmp.ge.f32.partialorder %v981, %v983
    %vm999 = vcmp.ge.f32.partialorder %v982, %v983
    %v1000 = vsel %vm984, %v863, 0.0
    %v1001 = vsel %vm985, %v864, 0.0
    %v1002 = vsel %vm986, %v865, 0.0
    %v1003 = vsel %vm987, %v866, 0.0
    %v1004 = vsel %vm988, %v867, 0.0
    %v1005 = vsel %vm989, %v868, 0.0
    %v1006 = vsel %vm990, %v869, 0.0
    %v1007 = vsel %vm991, %v870, 0.0
    %v1008 = vsel %vm992, %v871, 0.0
    %v1009 = vsel %vm993, %v872, 0.0
    %v1010 = vsel %vm994, %v873, 0.0
    %v1011 = vsel %vm995, %v874, 0.0
    %v1012 = vsel %vm996, %v875, 0.0
    %v1013 = vsel %vm997, %v876, 0.0
    %v1014 = vsel %vm998, %v877, 0.0
    %v1015 = vsel %vm999, %v878, 0.0
    %v1016 = vadd.f32 %v36, %v1000
    %v1017 = vadd.f32 %v37, %v1001
    %v1018 = vadd.f32 %v38, %v1002
    %v1019 = vadd.f32 %v39, %v1003
    %v1020 = vadd.f32 %v40, %v1004
    %v1021 = vadd.f32 %v41, %v1005
    %v1022 = vadd.f32 %v42, %v1006
    %v1023 = vadd.f32 %v43, %v1007
    %v1024 = vadd.f32 %v44, %v1008
    %v1025 = vadd.f32 %v45, %v1009
    %v1026 = vadd.f32 %v46, %v1010
    %v1027 = vadd.f32 %v47, %v1011
    %v1028 = vadd.f32 %v48, %v1012
    %v1029 = vadd.f32 %v49, %v1013
    %v1030 = vadd.f32 %v50, %v1014
    %v1031 = vadd.f32 %v51, %v1015
    %1032 = vst [vmem:[%s5] sm:$0xff] %v1016
    %1033 = vst [vmem:[%s5 + $0x8] sm:$0xff] %v1017
    %1034 = vst [vmem:[%s5 + $0x10] sm:$0xff] %v1018
    %1035 = vst [vmem:[%s5 + $0x18] sm:$0xff] %v1019
    %1036 = vst [vmem:[%s5 + $0x20] sm:$0xff] %v1020
    %1037 = vst [vmem:[%s5 + $0x28] sm:$0xff] %v1021
    %1038 = vst [vmem:[%s5 + $0x30] sm:$0xff] %v1022
    %1039 = vst [vmem:[%s5 + $0x38] sm:$0xff] %v1023
    %1040 = vst [vmem:[%s5 + $0x40] sm:$0xff] %v1024
    %1041 = vst [vmem:[%s5 + $0x48] sm:$0xff] %v1025
    %1042 = vst [vmem:[%s5 + $0x50] sm:$0xff] %v1026
    %1043 = vst [vmem:[%s5 + $0x58] sm:$0xff] %v1027
    %1044 = vst [vmem:[%s5 + $0x60] sm:$0xff] %v1028
    %1045 = vst [vmem:[%s5 + $0x68] sm:$0xff] %v1029
    %1046 = vst [vmem:[%s5 + $0x70] sm:$0xff] %v1030
    %1047 = vst [vmem:[%s5 + $0x78] sm:$0xff] %v1031
    %v1048 = vadd.f32 %v1016, %v1017
    %v1049 = vadd.f32 %v1048, %v1018
    %v1050 = vadd.f32 %v1049, %v1019
    %v1051 = vadd.f32 %v1050, %v1020
    %v1052 = vadd.f32 %v1051, %v1021
    %v1053 = vadd.f32 %v1052, %v1022
    %v1054 = vadd.f32 %v1053, %v1023
    %v1055 = vadd.f32 %v1054, %v1024
    %v1056 = vadd.f32 %v1055, %v1025
    %v1057 = vadd.f32 %v1056, %v1026
    %v1058 = vadd.f32 %v1057, %v1027
    %v1059 = vadd.f32 %v1058, %v1028
    %v1060 = vadd.f32 %v1059, %v1029
    %v1061 = vadd.f32 %v1060, %v1030
    %v1062 = vadd.f32 %v1061, %v1031
    %1063 = vadd.xlane.f32.xlu0 %v1062
    %v1064 = vpop.xlane.xlu0 %1063
    %v1065 = vrot.slane %v1064, 4
    %v1066 = vadd.f32 %v1064, %v1065
    %v1067 = vrot.slane %v1066, 2
    %v1068 = vadd.f32 %v1066, %v1067
    %v1069 = vrot.slane %v1068, 1
    %v1070 = vadd.f32 %v1068, %v1069
    %s1071 = vtos %v1070
    %s1072 = scalar_lea.smem [#allocation5], 0
    %1073 = sst [smem:[%s1072]] %s1071
    // Predicated region
    $region26: #{body.33} parent=1 // pred_check
      _
    $region27: #{body.33} parent=1 // pred_check_branch
      %1075 = sbr.rel (0) target = $region29
    $region28: #{body.33} parent=1 // pred_region
      _
    $region29: #{body.33} parent=1 // pred_fallthru
      _
    // Predicated region
    $region30: #{body.33} parent=1 // pred_check
      _
    $region31: #{body.33} parent=1 // pred_check_branch
      %1077 = sbr.rel (0) target = $region33
    $region32: #{body.33} parent=1 // pred_region
      %1079 = vsyncadd [#allocation3], 0
      %s1081 = sshll.u32 %s6, 4
      %s1082 = int_to_ptr.hbm [resolvable:$true] %s1081
      %1084 = dma.smem_to_hbm [#allocation5], 16, %s1082, [#allocation3]
    $region33: #{body.33} parent=1 // pred_fallthru
      _
    // Predicated region
    $region34: #{body.33} parent=1 // pred_check
      _
    $region35: #{body.33} parent=1 // pred_check_branch
      %1086 = sbr.rel (0) target = $region37
    $region36: #{body.33} parent=1 // pred_region
      _
    $region37: #{body.33} parent=1 // pred_fallthru
      _
    // Predicated region
    $region38: #{body.33} parent=1 // pred_check
      _
    $region39: #{body.33} parent=1 // pred_check_branch
      %1088 = sbr.rel (0) target = $region41
    $region40: #{body.33} parent=1 // pred_region
      %1090 = dma.done [#allocation3], 16
    $region41: #{body.33} parent=1 // pred_fallthru
      _
    %1091 = sfence
    %1092 = vsyncpa [#allocation3], 1
    %1093 = vsyncpa [#allocation4], 1

</llo_original>
